<compile_context>
chip_gen: v6e
topology: v6e:2x2x1
jax: 0.10.0
libtpu: 0.0.40
codegen_flags: <defaults>
</compile_context>

<pallas_src>
import numpy as np
import jax
import jax.numpy as jnp
from jax import lax
from jax.experimental import pallas as pl
from jax.experimental.pallas import tpu as pltpu

FILTER_LENGTH = 64                    # STFT(FILTER_LENGTH, HOP_LENGTH)
HOP_LENGTH = 32
CUTOFF = FILTER_LENGTH // 2 + 1       # 33 frequency bins
FREQ_PAD = 64                         # lane-padded width per component
FUSED_WIDTH = 2 * FREQ_PAD            # [ real | imag ] fused basis width
EPS = 1e-8


def _round_up(x, m):
    return ((x + m - 1) // m) * m


def _make_fused_basis(dtype=jnp.bfloat16):
    """[2, 32, 128]: B_lo acts on hop j, B_hi on hop j+1.

    Columns 0..32 are windowed real DFT rows, 64..96 imag, rest zero.
    Periodic Hann window (torch.hann_window default).
    """
    n = np.arange(FILTER_LENGTH)
    window = 0.5 - 0.5 * np.cos(2.0 * np.pi * n / FILTER_LENGTH)
    fourier = np.fft.fft(np.eye(FILTER_LENGTH))
    real_b = (np.real(fourier[:CUTOFF]) * window[None, :]).T    # [64, 33]
    imag_b = (np.imag(fourier[:CUTOFF]) * window[None, :]).T    # [64, 33]
    fused = np.zeros((FILTER_LENGTH, FUSED_WIDTH), np.float32)
    fused[:, :CUTOFF] = real_b
    fused[:, FREQ_PAD:FREQ_PAD + CUTOFF] = imag_b
    # Split the 64 window rows into [hop j | hop j+1] halves.
    return jnp.asarray(fused.reshape(2, HOP_LENGTH, FUSED_WIDTH), dtype)


def _make_kernel(ft):
    """Kernel for a (static) frame tile of `ft` frames."""

    def kernel(mix_ref, mixn_ref, sp_ref, spn_ref, ns_ref, nsn_ref,
               basis_ref, out_ref):
        # *_ref    : (1, ft, 32)  hop block t of the signal (f32)
        # *n_ref   : (1, 8, 32)   first 8 hops of block t+1 (boundary sliver)
        # basis_ref: (2, 32, 128) fused [real|imag] bf16 basis, split lo/hi
        # out_ref  : (1, ft, 128) fused output: lanes 0..63 mix_mag,
        #                         lanes 64..127 IRM label
        b_lo = basis_ref[0]                       # (32, 128) bf16
        b_hi = basis_ref[1]                       # (32, 128) bf16

        def mag128(main_ref, next_ref):
            lo = main_ref[0]                                      # (ft, 32)
            # Aligned sublane concat (ft % 8 == 0), then a static offset-1
            # slice gives hop j+1 for every frame j of the tile.
            ext = jnp.concatenate([lo, next_ref[0]], axis=0)      # (ft+8, 32)
            hi = ext[1:ft + 1, :]                                 # (ft, 32)
            z = (jnp.dot(lo.astype(jnp.bfloat16), b_lo,
                         preferred_element_type=jnp.float32)
                 + jnp.dot(hi.astype(jnp.bfloat16), b_hi,
                           preferred_element_type=jnp.float32))   # (ft, 128)
            z2 = z * z
            # lanes 0..32 = re^2, 64..96 = im^2.  A half-width lane rotate
            # (XLU, direction-agnostic since 64 == -64 mod 128) + add leaves
            # |.|^2 duplicated in both 64-lane halves.
            return jnp.sqrt(z2 + pltpu.roll(z2, shift=FREQ_PAD, axis=1))

        sp_mag = mag128(sp_ref, spn_ref)
        ns_mag = mag128(ns_ref, nsn_ref)
        label = sp_mag / (sp_mag + ns_mag + EPS)     # exact IRM divide
        mix_mag = mag128(mix_ref, mixn_ref)

        lane = lax.broadcasted_iota(jnp.int32, (ft, FUSED_WIDTH), 1)
        # Single lane-dense 128-wide store: [ mix_mag | label ].
        out_ref[0] = jnp.where(lane < FREQ_PAD, mix_mag, label)

    return kernel


def feature_creator(mix, speech, noise, nframe, *, frame_tile=1024):
    """Pallas equivalent of FeatureCreator.forward -> (mix_mag, label, nframe)."""
    assert frame_tile % 8 == 0 and frame_tile >= 8
    b, n_samples = mix.shape
    n_frames = (n_samples - FILTER_LENGTH) // HOP_LENGTH + 1
    assert n_frames >= 1
    n_hops = n_frames + 1

    # Clamp the tile so short clips do not write a huge padded tail.
    ft = min(frame_tile, _round_up(n_frames, 8))
    num_tiles = pl.cdiv(n_frames, ft)
    n_blk8 = pl.cdiv(n_hops, 8)                   # 8-hop block count (sliver grid)

    def to_hops(x):
        # Pure reshape of the raw waveform -> hop matrix [B, n_hops, 32].
        # No pad, no stack: no extra HBM pass before the kernel.
        x = x.astype(jnp.float32)
        if x.shape[1] != n_hops * HOP_LENGTH:
            x = x[:, :n_hops * HOP_LENGTH]
        return x.reshape(b, n_hops, HOP_LENGTH)

    mix_h, sp_h, ns_h = to_hops(mix), to_hops(speech), to_hops(noise)
    basis = _make_fused_basis()

    # Hop block t of the signal (tail tile may be a partial block).
    main_spec = pl.BlockSpec((1, ft, HOP_LENGTH), lambda i, t: (i, t, 0))
    # First 8 hops of block t+1 (clamped); only row 0 is consumed and it only
    # matters when the tile's last frame is a valid frame.
    next_spec = pl.BlockSpec(
        (1, 8, HOP_LENGTH),
        lambda i, t: (i, jnp.minimum((t + 1) * (ft // 8), n_blk8 - 1), 0))
    basis_spec = pl.BlockSpec((2, HOP_LENGTH, FUSED_WIDTH),
                              lambda i, t: (0, 0, 0))
    out_spec = pl.BlockSpec((1, ft, FUSED_WIDTH), lambda i, t: (i, t, 0))

    fused = pl.pallas_call(
        _make_kernel(ft),
        out_shape=jax.ShapeDtypeStruct((b, num_tiles * ft, FUSED_WIDTH),
                                       jnp.float32),
        grid=(b, num_tiles),
        in_specs=[main_spec, next_spec,     # mix
                  main_spec, next_spec,     # speech
                  main_spec, next_spec,     # noise
                  basis_spec],
        out_specs=out_spec,
        compiler_params=pltpu.CompilerParams(
            dimension_semantics=("parallel", "parallel"),
            vmem_limit_bytes=32 * 1024 * 1024),
    )(mix_h, mix_h, sp_h, sp_h, ns_h, ns_h, basis)

    # Single wrapper split of the fused lane-dense output (kept only because
    # the module's return shapes require the 33-bin layout).
    mix_mag = fused[:, :n_frames, :CUTOFF][:, None, :, :]               # [B,1,T,F]
    label = fused[:, :n_frames, FREQ_PAD:FREQ_PAD + CUTOFF][:, None, :, :]
    return mix_mag, label, nframe


def _reference(mix, speech, noise):
    """Pure-numpy (float64) ground truth for the sanity check."""
    n = np.arange(FILTER_LENGTH)
    window = 0.5 - 0.5 * np.cos(2.0 * np.pi * n / FILTER_LENGTH)
    fourier = np.fft.fft(np.eye(FILTER_LENGTH))
    real_b = (np.real(fourier[:CUTOFF]) * window[None, :]).T
    imag_b = (np.imag(fourier[:CUTOFF]) * window[None, :]).T

    def spec_mag(x):
        x = np.asarray(x, np.float64)
        nsmp = x.shape[1]
        nf = (nsmp - FILTER_LENGTH) // HOP_LENGTH + 1
        idx = (np.arange(nf)[:, None] * HOP_LENGTH
               + np.arange(FILTER_LENGTH)[None, :])
        f = x[:, idx]                                   # [B, nf, 64]
        re = f @ real_b
        im = f @ imag_b
        return np.sqrt(re * re + im * im)[:, None, :, :]

    mix_mag = spec_mag(mix)
    sp_mag = spec_mag(speech)
    ns_mag = spec_mag(noise)
    return mix_mag, sp_mag / (sp_mag + ns_mag + EPS)


if __name__ == "__main__":
    key = jax.random.PRNGKey(0)
    k_mix, k_sp, k_ns = jax.random.split(key, 3)

    B = 2
    N_FRAMES = 300                                      # not a tile multiple
    NUM_SAMPLES = FILTER_LENGTH + (N_FRAMES - 1) * HOP_LENGTH   # 9632 samples

    mix = jax.random.normal(k_mix, (B, NUM_SAMPLES), dtype=jnp.float32)
    speech = jax.random.normal(k_sp, (B, NUM_SAMPLES), dtype=jnp.float32)
    noise = jax.random.normal(k_ns, (B, NUM_SAMPLES), dtype=jnp.float32)
    nframe = jnp.full((B,), N_FRAMES, dtype=jnp.int32)

    # Small frame_tile so the test exercises the multi-tile path, the
    # tile-boundary next-hop fetch, and the partial tail tile.
    mix_mag, label, nframe_out = feature_creator(mix, speech, noise, nframe,
                                                 frame_tile=128)
    jax.block_until_ready((mix_mag, label, nframe_out))

    ref_mag, ref_label = _reference(np.asarray(mix), np.asarray(speech),
                                    np.asarray(noise))

    # Error budget: bf16 MXU operands (~2^-9 relative per term over a 64-term
    # dot) -> small relative / absolute deviations vs the float64 reference.
    np.testing.assert_allclose(np.asarray(mix_mag), ref_mag, rtol=2e-2, atol=1e-1)
    np.testing.assert_allclose(np.asarray(label), ref_label, rtol=2e-2, atol=1e-1)

    assert mix_mag.shape == (B, 1, N_FRAMES, CUTOFF)
    assert label.shape == (B, 1, N_FRAMES, CUTOFF)
    assert nframe_out.shape == (B,)
    print("KERNEL_OK")
</pallas_src>

<mosaic_0001>
module attributes {stable_mosaic.version = 11 : i64} {
  func.func @kernel(%arg0: i32, %arg1: i32, %arg2: memref<1x128x32xf32, #tpu.memory_space<vmem>>, %arg3: memref<1x8x32xf32, #tpu.memory_space<vmem>>, %arg4: memref<1x128x32xf32, #tpu.memory_space<vmem>>, %arg5: memref<1x8x32xf32, #tpu.memory_space<vmem>>, %arg6: memref<1x128x32xf32, #tpu.memory_space<vmem>>, %arg7: memref<1x8x32xf32, #tpu.memory_space<vmem>>, %arg8: memref<2x32x128xbf16, #tpu.memory_space<vmem>>, %arg9: memref<1x128x128xf32, #tpu.memory_space<vmem>>) attributes {dimension_semantics = [#tpu.dimension_semantics<parallel>, #tpu.dimension_semantics<parallel>], iteration_bounds = array<i64: 2, 3>, scalar_prefetch = 0 : i64, scratch_operands = 0 : i64, tpu.core_type = #tpu.core_type<tc>, window_params = [{transform_indices = @transform_0, window_bounds = array<i64: 1, 128, 32>}, {transform_indices = @transform_1, window_bounds = array<i64: 1, 8, 32>}, {transform_indices = @transform_2, window_bounds = array<i64: 1, 128, 32>}, {transform_indices = @transform_3, window_bounds = array<i64: 1, 8, 32>}, {transform_indices = @transform_4, window_bounds = array<i64: 1, 128, 32>}, {transform_indices = @transform_5, window_bounds = array<i64: 1, 8, 32>}, {pipeline_mode = #tpu.pipeline_mode<synchronous>, transform_indices = @transform_6, window_bounds = array<i64: 2, 32, 128>}, {transform_indices = @transform_7, window_bounds = array<i64: 1, 128, 128>}]} {
    %c0 = arith.constant 0 : index
    %c0_0 = arith.constant 0 : index
    %c0_1 = arith.constant 0 : index
    %0 = vector.load %arg8[%c0, %c0_0, %c0_1] : memref<2x32x128xbf16, #tpu.memory_space<vmem>>, vector<1x32x128xbf16>
    %1 = vector.shape_cast %0 : vector<1x32x128xbf16> to vector<32x128xbf16>
    %c1 = arith.constant 1 : index
    %c0_2 = arith.constant 0 : index
    %c0_3 = arith.constant 0 : index
    %2 = vector.load %arg8[%c1, %c0_2, %c0_3] : memref<2x32x128xbf16, #tpu.memory_space<vmem>>, vector<1x32x128xbf16>
    %3 = vector.shape_cast %2 : vector<1x32x128xbf16> to vector<32x128xbf16>
    %c0_4 = arith.constant 0 : index
    %c0_5 = arith.constant 0 : index
    %c0_6 = arith.constant 0 : index
    %4 = vector.load %arg4[%c0_4, %c0_5, %c0_6] : memref<1x128x32xf32, #tpu.memory_space<vmem>>, vector<1x128x32xf32>
    %5 = vector.shape_cast %4 : vector<1x128x32xf32> to vector<128x32xf32>
    %c0_7 = arith.constant 0 : index
    %c0_8 = arith.constant 0 : index
    %c0_9 = arith.constant 0 : index
    %6 = vector.load %arg5[%c0_7, %c0_8, %c0_9] : memref<1x8x32xf32, #tpu.memory_space<vmem>>, vector<1x8x32xf32>
    %7 = vector.shape_cast %6 : vector<1x8x32xf32> to vector<8x32xf32>
    %8 = tpu.concatenate %5, %7 in 0 : vector<128x32xf32>, vector<8x32xf32> -> vector<136x32xf32>
    %9 = vector.extract_strided_slice %8 {offsets = [1, 0], sizes = [128, 32], strides = [1, 1]} : vector<136x32xf32> to vector<128x32xf32>
    %10 = arith.truncf %5 : vector<128x32xf32> to vector<128x32xbf16>
    %cst = arith.constant dense<0.000000e+00> : vector<128x128xf32>
    %11 = tpu.matmul %10, %1, %cst {dimension_numbers = #tpu.dot_dimension_numbers<[1], [0], [0], [1], [0, 0, 1, 1], [], []>} : vector<128x32xbf16>, vector<32x128xbf16>, vector<128x128xf32> -> vector<128x128xf32>
    %12 = arith.truncf %9 : vector<128x32xf32> to vector<128x32xbf16>
    %cst_10 = arith.constant dense<0.000000e+00> : vector<128x128xf32>
    %13 = tpu.matmul %12, %3, %cst_10 {dimension_numbers = #tpu.dot_dimension_numbers<[1], [0], [0], [1], [0, 0, 1, 1], [], []>} : vector<128x32xbf16>, vector<32x128xbf16>, vector<128x128xf32> -> vector<128x128xf32>
    %14 = arith.addf %11, %13 : vector<128x128xf32>
    %15 = arith.mulf %14, %14 : vector<128x128xf32>
    %c64_i32 = arith.constant 64 : i32
    %16 = tpu.dynamic_rotate %15 by %c64_i32 dim 1 : vector<128x128xf32>, i32 -> vector<128x128xf32>
    %17 = arith.addf %15, %16 : vector<128x128xf32>
    %18 = math.sqrt %17 : vector<128x128xf32>
    %c0_11 = arith.constant 0 : index
    %c0_12 = arith.constant 0 : index
    %c0_13 = arith.constant 0 : index
    %19 = vector.load %arg6[%c0_11, %c0_12, %c0_13] : memref<1x128x32xf32, #tpu.memory_space<vmem>>, vector<1x128x32xf32>
    %20 = vector.shape_cast %19 : vector<1x128x32xf32> to vector<128x32xf32>
    %c0_14 = arith.constant 0 : index
    %c0_15 = arith.constant 0 : index
    %c0_16 = arith.constant 0 : index
    %21 = vector.load %arg7[%c0_14, %c0_15, %c0_16] : memref<1x8x32xf32, #tpu.memory_space<vmem>>, vector<1x8x32xf32>
    %22 = vector.shape_cast %21 : vector<1x8x32xf32> to vector<8x32xf32>
    %23 = tpu.concatenate %20, %22 in 0 : vector<128x32xf32>, vector<8x32xf32> -> vector<136x32xf32>
    %24 = vector.extract_strided_slice %23 {offsets = [1, 0], sizes = [128, 32], strides = [1, 1]} : vector<136x32xf32> to vector<128x32xf32>
    %25 = arith.truncf %20 : vector<128x32xf32> to vector<128x32xbf16>
    %cst_17 = arith.constant dense<0.000000e+00> : vector<128x128xf32>
    %26 = tpu.matmul %25, %1, %cst_17 {dimension_numbers = #tpu.dot_dimension_numbers<[1], [0], [0], [1], [0, 0, 1, 1], [], []>} : vector<128x32xbf16>, vector<32x128xbf16>, vector<128x128xf32> -> vector<128x128xf32>
    %27 = arith.truncf %24 : vector<128x32xf32> to vector<128x32xbf16>
    %cst_18 = arith.constant dense<0.000000e+00> : vector<128x128xf32>
    %28 = tpu.matmul %27, %3, %cst_18 {dimension_numbers = #tpu.dot_dimension_numbers<[1], [0], [0], [1], [0, 0, 1, 1], [], []>} : vector<128x32xbf16>, vector<32x128xbf16>, vector<128x128xf32> -> vector<128x128xf32>
    %29 = arith.addf %26, %28 : vector<128x128xf32>
    %30 = arith.mulf %29, %29 : vector<128x128xf32>
    %c64_i32_19 = arith.constant 64 : i32
    %31 = tpu.dynamic_rotate %30 by %c64_i32_19 dim 1 : vector<128x128xf32>, i32 -> vector<128x128xf32>
    %32 = arith.addf %30, %31 : vector<128x128xf32>
    %33 = math.sqrt %32 : vector<128x128xf32>
    %34 = arith.addf %18, %33 : vector<128x128xf32>
    %cst_20 = arith.constant 9.99999993E-9 : f32
    %35 = vector.broadcast %cst_20 : f32 to vector<128x128xf32>
    %36 = arith.addf %34, %35 : vector<128x128xf32>
    %37 = arith.divf %18, %36 : vector<128x128xf32>
    %c0_21 = arith.constant 0 : index
    %c0_22 = arith.constant 0 : index
    %c0_23 = arith.constant 0 : index
    %38 = vector.load %arg2[%c0_21, %c0_22, %c0_23] : memref<1x128x32xf32, #tpu.memory_space<vmem>>, vector<1x128x32xf32>
    %39 = vector.shape_cast %38 : vector<1x128x32xf32> to vector<128x32xf32>
    %c0_24 = arith.constant 0 : index
    %c0_25 = arith.constant 0 : index
    %c0_26 = arith.constant 0 : index
    %40 = vector.load %arg3[%c0_24, %c0_25, %c0_26] : memref<1x8x32xf32, #tpu.memory_space<vmem>>, vector<1x8x32xf32>
    %41 = vector.shape_cast %40 : vector<1x8x32xf32> to vector<8x32xf32>
    %42 = tpu.concatenate %39, %41 in 0 : vector<128x32xf32>, vector<8x32xf32> -> vector<136x32xf32>
    %43 = vector.extract_strided_slice %42 {offsets = [1, 0], sizes = [128, 32], strides = [1, 1]} : vector<136x32xf32> to vector<128x32xf32>
    %44 = arith.truncf %39 : vector<128x32xf32> to vector<128x32xbf16>
    %cst_27 = arith.constant dense<0.000000e+00> : vector<128x128xf32>
    %45 = tpu.matmul %44, %1, %cst_27 {dimension_numbers = #tpu.dot_dimension_numbers<[1], [0], [0], [1], [0, 0, 1, 1], [], []>} : vector<128x32xbf16>, vector<32x128xbf16>, vector<128x128xf32> -> vector<128x128xf32>
    %46 = arith.truncf %43 : vector<128x32xf32> to vector<128x32xbf16>
    %cst_28 = arith.constant dense<0.000000e+00> : vector<128x128xf32>
    %47 = tpu.matmul %46, %3, %cst_28 {dimension_numbers = #tpu.dot_dimension_numbers<[1], [0], [0], [1], [0, 0, 1, 1], [], []>} : vector<128x32xbf16>, vector<32x128xbf16>, vector<128x128xf32> -> vector<128x128xf32>
    %48 = arith.addf %45, %47 : vector<128x128xf32>
    %49 = arith.mulf %48, %48 : vector<128x128xf32>
    %c64_i32_29 = arith.constant 64 : i32
    %50 = tpu.dynamic_rotate %49 by %c64_i32_29 dim 1 : vector<128x128xf32>, i32 -> vector<128x128xf32>
    %51 = arith.addf %49, %50 : vector<128x128xf32>
    %52 = math.sqrt %51 : vector<128x128xf32>
    %53 = tpu.iota {dimensions = array<i32: 1>} : vector<128x128xi32>
    %c64_i32_30 = arith.constant 64 : i32
    %54 = vector.broadcast %c64_i32_30 : i32 to vector<128x128xi32>
    %55 = arith.cmpi slt, %53, %54 : vector<128x128xi32>
    %56 = arith.select %55, %52, %37 : vector<128x128xi1>, vector<128x128xf32>
    %c0_31 = arith.constant 0 : index
    %c0_32 = arith.constant 0 : index
    %c0_33 = arith.constant 0 : index
    %57 = vector.load %arg9[%c0_31, %c0_32, %c0_33] : memref<1x128x128xf32, #tpu.memory_space<vmem>>, vector<1x128x128xf32>
    %58 = vector.shape_cast %57 : vector<1x128x128xf32> to vector<128x128xf32>
    %59 = vector.shape_cast %56 : vector<128x128xf32> to vector<1x128x128xf32>
    tpu.vector_store %arg9[%c0_31, %c0_32, %c0_33], %59 {strides = array<i32>} : memref<1x128x128xf32, #tpu.memory_space<vmem>>, vector<1x128x128xf32>,
    return
  }
  func.func @transform_0(%arg0: i32, %arg1: i32) -> (i32, i32, i32) {
    %c0_i32 = arith.constant 0 : i32
    %c0_i32_0 = arith.constant 0 : i32
    return %arg0, %arg1, %c0_i32 : i32, i32, i32
  }
  func.func @transform_1(%arg0: i32, %arg1: i32) -> (i32, i32, i32) {
    %c1_i32 = arith.constant 1 : i32
    %0 = arith.addi %arg1, %c1_i32 : i32
    %c16_i32 = arith.constant 16 : i32
    %1 = arith.muli %0, %c16_i32 : i32
    %c37_i32 = arith.constant 37 : i32
    %2 = arith.minsi %1, %c37_i32 : i32
    %c0_i32 = arith.constant 0 : i32
    %c0_i32_0 = arith.constant 0 : i32
    return %arg0, %2, %c0_i32 : i32, i32, i32
  }
  func.func @transform_2(%arg0: i32, %arg1: i32) -> (i32, i32, i32) {
    %c0_i32 = arith.constant 0 : i32
    %c0_i32_0 = arith.constant 0 : i32
    return %arg0, %arg1, %c0_i32 : i32, i32, i32
  }
  func.func @transform_3(%arg0: i32, %arg1: i32) -> (i32, i32, i32) {
    %c1_i32 = arith.constant 1 : i32
    %0 = arith.addi %arg1, %c1_i32 : i32
    %c16_i32 = arith.constant 16 : i32
    %1 = arith.muli %0, %c16_i32 : i32
    %c37_i32 = arith.constant 37 : i32
    %2 = arith.minsi %1, %c37_i32 : i32
    %c0_i32 = arith.constant 0 : i32
    %c0_i32_0 = arith.constant 0 : i32
    return %arg0, %2, %c0_i32 : i32, i32, i32
  }
  func.func @transform_4(%arg0: i32, %arg1: i32) -> (i32, i32, i32) {
    %c0_i32 = arith.constant 0 : i32
    %c0_i32_0 = arith.constant 0 : i32
    return %arg0, %arg1, %c0_i32 : i32, i32, i32
  }
  func.func @transform_5(%arg0: i32, %arg1: i32) -> (i32, i32, i32) {
    %c1_i32 = arith.constant 1 : i32
    %0 = arith.addi %arg1, %c1_i32 : i32
    %c16_i32 = arith.constant 16 : i32
    %1 = arith.muli %0, %c16_i32 : i32
    %c37_i32 = arith.constant 37 : i32
    %2 = arith.minsi %1, %c37_i32 : i32
    %c0_i32 = arith.constant 0 : i32
    %c0_i32_0 = arith.constant 0 : i32
    return %arg0, %2, %c0_i32 : i32, i32, i32
  }
  func.func @transform_6(%arg0: i32, %arg1: i32) -> (i32, i32, i32) {
    %c0_i32 = arith.constant 0 : i32
    %c0_i32_0 = arith.constant 0 : i32
    %c0_i32_1 = arith.constant 0 : i32
    %c0_i32_2 = arith.constant 0 : i32
    return %c0_i32, %c0_i32_0, %c0_i32_1 : i32, i32, i32
  }
  func.func @transform_7(%arg0: i32, %arg1: i32) -> (i32, i32, i32) {
    %c0_i32 = arith.constant 0 : i32
    %c0_i32_0 = arith.constant 0 : i32
    return %arg0, %arg1, %c0_i32 : i32, i32, i32
  }
}

</mosaic_0001>

<llo_original>
// kernel: tpu_custom_call.1
$region0: #{tpu_custom_call.1}
  #allocation0 [shape = 'u32[]', space=smem, size = 0x4, offset = 0x4, fixed_abs, tag = 'smem constant byte address 0x4 - core index']
  #allocation1 [shape = 'u32[144,128]{1,0:T(1,128)}', space=vmem, size = 0x12000, scoped, tag = 'internal scratch']
  %s0 = inlined_call_operand.vmem [shape: f32[2,301,32], index: 0, kind: input, shape index: {}]
  %s1 = inlined_call_operand.vmem [shape: f32[2,301,32], index: 1, kind: input, shape index: {}]
  %s2 = inlined_call_operand.vmem [shape: f32[2,301,32], index: 2, kind: input, shape index: {}]
  %s3 = inlined_call_operand.vmem [shape: f32[2,301,32], index: 3, kind: input, shape index: {}]
  %s4 = inlined_call_operand.vmem [shape: f32[2,301,32], index: 4, kind: input, shape index: {}]
  %s5 = inlined_call_operand.vmem [shape: f32[2,301,32], index: 5, kind: input, shape index: {}]
  %s6 = inlined_call_operand.vmem [shape: bf16[2,32,128], index: 6, kind: input, shape index: {}]
  %s7 = inlined_call_operand.hbm [shape: f32[2,384,128], index: 7, kind: output, shape index: {}]
  %s8 = sld [smem:[#allocation0]]
  $region61: #{tpu_custom_call.1} parent=0
    _
  %s10 = ssub.s32 1, %s8
  %s11 = scalar_select 0, %s10, %s8
  $region1: #{tpu_custom_call.1} parent=0
    #allocation2 [shape = 'u8[131072]{0}', space=vmem, size = 0x20000, scoped, tag = 'output window, operand 0']
    #allocation3 [shape = 's32[2]{0}', space=sflag, size = 0x8, scoped, tag = 'scoped memory for tpu_custom_call.1']
    %12 = vsyncpa [#allocation3], 0
    %s13 = scalar_lea.sflag [#allocation3], 1
    %14 = vsyncpa %s13, 0
    loop: start=0, step=1, limit=8
    $region2: #{tpu_custom_call.1} parent=1 // loop_pre_header
      _
    $region3: #{tpu_custom_call.1} parent=1 // loop_header
      %s16 = sphi 0, %s20
      %p17 = scmp.ge.s32.totalorder %s16, 8
      %s23 = sphi 0, %s35
      %s24 = sphi 0, %s31
      %s25 = sphi 0, %s23
      %s26 = sphi 0, %s24
      %s27 = sphi 0, %s25
      %s28 = sphi 0, %s26
      %s40 = sphi 0, %s42
      %s43 = sphi 0, %s40
      %s44 = sphi 0, %s43
      %s60 = sphi 0, %s44
      %s76 = sphi 0, %s78
      %s79 = sphi 0, %s76
      %s80 = sphi 0, %s79
      %s96 = sphi 0, %s80
      %s104 = sphi 0, %s106
      %s107 = sphi 0, %s104
      %s108 = sphi 0, %s107
      %s124 = sphi 0, %s108
      %s140 = sphi 0, %s142
      %s143 = sphi 0, %s140
      %s144 = sphi 0, %s143
      %s160 = sphi 0, %s144
      %s168 = sphi 0, %s170
      %s171 = sphi 0, %s168
      %s172 = sphi 0, %s171
      %s188 = sphi 0, %s172
      %s204 = sphi 0, %s206
      %s207 = sphi 0, %s204
      %s208 = sphi 0, %s207
      %s224 = sphi 0, %s208
      %s228 = sphi 0, %s228
      %s230 = sphi 0, %s228
      %s231 = sphi 0, %s230
      %s245 = sphi 0, %s231
      %s253 = sphi 0, %s255
      %s256 = sphi 0, %s253
      %s257 = sphi 0, %s256
      %s273 = sphi 0, %s257
    $region4: #{tpu_custom_call.1} parent=1 // loop_header_branch
      %19 = sbr.rel (%p17) target = $region8
    $region5: #{tpu_custom_call.1} parent=1 // loop_body
      %s21 = ssub.s32 %s16, 1
      %s22 = ssub.s32 %s16, 2
      %s29 = sadd.s32 1, %s24
      %p30 = scmp.ge.s32.totalorder %s29, 3
      %s31 = scalar_select %p30, 0, %s29
      %s32 = sadd.s32 1, %s23
      %s33 = scalar_select %p30, %s32, %s23
      %p34 = scmp.ge.s32.totalorder %s33, 2
      %s35 = scalar_select %p34, 0, %s33
      %s36 = ssub.s32 %s23, %s35
      %s37 = ssub.s32 %s24, %s31
      %s38 = sor.u32 %s36, %s37
      %p39 = scmp.eq.s32.totalorder %s38, 0
      %s41 = sadd.s32 %s40, 1
      %s42 = scalar_select %p39, %s40, %s41
      %p45 = pneg %p39
      %p46 = scmp.eq.s32.totalorder %s16, 5
      %p47 = por %p45, %p46
      %p48 = scmp.ne.s32.totalorder %s40, %s43
      %p49 = scmp.eq.s32.totalorder %s16, 0
      %p50 = por %p48, %p49
      %p51 = scmp.ne.s32.totalorder %s40, %s43
      %p52 = scmp.eq.s32.totalorder %s21, 5
      %p53 = por %p51, %p52
      %p54 = scmp.ne.s32.totalorder %s43, %s44
      %p55 = scmp.eq.s32.totalorder %s21, 0
      %p56 = por %p54, %p55
      %p57 = scmp.ne.s32.totalorder %s43, %s44
      %p58 = scmp.eq.s32.totalorder %s22, 5
      %p59 = por %p57, %p58
      %p61 = scmp.ne.s32.totalorder %s44, %s60
      %p62 = scmp.eq.s32.totalorder %s22, 0
      %p63 = por %p61, %p62
      %s64 = sadd.s32 %s24, 1
      %s65 = smul.u32 %s64, 16
      %p66 = scmp.lt.s32.totalorder %s65, 37
      %s67 = scalar_select %p66, %s65, 37
      %s68 = sadd.s32 %s31, 1
      %s69 = smul.u32 %s68, 16
      %p70 = scmp.lt.s32.totalorder %s69, 37
      %s71 = scalar_select %p70, %s69, 37
      %s72 = ssub.s32 %s23, %s35
      %s73 = ssub.s32 %s67, %s71
      %s74 = sor.u32 %s72, %s73
      %p75 = scmp.eq.s32.totalorder %s74, 0
      %s77 = sadd.s32 %s76, 1
      %s78 = scalar_select %p75, %s76, %s77
      %p81 = pneg %p75
      %p82 = scmp.eq.s32.totalorder %s16, 5
      %p83 = por %p81, %p82
      %p84 = scmp.ne.s32.totalorder %s76, %s79
      %p85 = scmp.eq.s32.totalorder %s16, 0
      %p86 = por %p84, %p85
      %p87 = scmp.ne.s32.totalorder %s76, %s79
      %p88 = scmp.eq.s32.totalorder %s21, 5
      %p89 = por %p87, %p88
      %p90 = scmp.ne.s32.totalorder %s79, %s80
      %p91 = scmp.eq.s32.totalorder %s21, 0
      %p92 = por %p90, %p91
      %p93 = scmp.ne.s32.totalorder %s79, %s80
      %p94 = scmp.eq.s32.totalorder %s22, 5
      %p95 = por %p93, %p94
      %p97 = scmp.ne.s32.totalorder %s80, %s96
      %p98 = scmp.eq.s32.totalorder %s22, 0
      %p99 = por %p97, %p98
      %s100 = ssub.s32 %s23, %s35
      %s101 = ssub.s32 %s24, %s31
      %s102 = sor.u32 %s100, %s101
      %p103 = scmp.eq.s32.totalorder %s102, 0
      %s105 = sadd.s32 %s104, 1
      %s106 = scalar_select %p103, %s104, %s105
      %p109 = pneg %p103
      %p110 = scmp.eq.s32.totalorder %s16, 5
      %p111 = por %p109, %p110
      %p112 = scmp.ne.s32.totalorder %s104, %s107
      %p113 = scmp.eq.s32.totalorder %s16, 0
      %p114 = por %p112, %p113
      %p115 = scmp.ne.s32.totalorder %s104, %s107
      %p116 = scmp.eq.s32.totalorder %s21, 5
      %p117 = por %p115, %p116
      %p118 = scmp.ne.s32.totalorder %s107, %s108
      %p119 = scmp.eq.s32.totalorder %s21, 0
      %p120 = por %p118, %p119
      %p121 = scmp.ne.s32.totalorder %s107, %s108
      %p122 = scmp.eq.s32.totalorder %s22, 5
      %p123 = por %p121, %p122
      %p125 = scmp.ne.s32.totalorder %s108, %s124
      %p126 = scmp.eq.s32.totalorder %s22, 0
      %p127 = por %p125, %p126
      %s128 = sadd.s32 %s24, 1
      %s129 = smul.u32 %s128, 16
      %p130 = scmp.lt.s32.totalorder %s129, 37
      %s131 = scalar_select %p130, %s129, 37
      %s132 = sadd.s32 %s31, 1
      %s133 = smul.u32 %s132, 16
      %p134 = scmp.lt.s32.totalorder %s133, 37
      %s135 = scalar_select %p134, %s133, 37
      %s136 = ssub.s32 %s23, %s35
      %s137 = ssub.s32 %s131, %s135
      %s138 = sor.u32 %s136, %s137
      %p139 = scmp.eq.s32.totalorder %s138, 0
      %s141 = sadd.s32 %s140, 1
      %s142 = scalar_select %p139, %s140, %s141
      %p145 = pneg %p139
      %p146 = scmp.eq.s32.totalorder %s16, 5
      %p147 = por %p145, %p146
      %p148 = scmp.ne.s32.totalorder %s140, %s143
      %p149 = scmp.eq.s32.totalorder %s16, 0
      %p150 = por %p148, %p149
      %p151 = scmp.ne.s32.totalorder %s140, %s143
      %p152 = scmp.eq.s32.totalorder %s21, 5
      %p153 = por %p151, %p152
      %p154 = scmp.ne.s32.totalorder %s143, %s144
      %p155 = scmp.eq.s32.totalorder %s21, 0
      %p156 = por %p154, %p155
      %p157 = scmp.ne.s32.totalorder %s143, %s144
      %p158 = scmp.eq.s32.totalorder %s22, 5
      %p159 = por %p157, %p158
      %p161 = scmp.ne.s32.totalorder %s144, %s160
      %p162 = scmp.eq.s32.totalorder %s22, 0
      %p163 = por %p161, %p162
      %s164 = ssub.s32 %s23, %s35
      %s165 = ssub.s32 %s24, %s31
      %s166 = sor.u32 %s164, %s165
      %p167 = scmp.eq.s32.totalorder %s166, 0
      %s169 = sadd.s32 %s168, 1
      %s170 = scalar_select %p167, %s168, %s169
      %p173 = pneg %p167
      %p174 = scmp.eq.s32.totalorder %s16, 5
      %p175 = por %p173, %p174
      %p176 = scmp.ne.s32.totalorder %s168, %s171
      %p177 = scmp.eq.s32.totalorder %s16, 0
      %p178 = por %p176, %p177
      %p179 = scmp.ne.s32.totalorder %s168, %s171
      %p180 = scmp.eq.s32.totalorder %s21, 5
      %p181 = por %p179, %p180
      %p182 = scmp.ne.s32.totalorder %s171, %s172
      %p183 = scmp.eq.s32.totalorder %s21, 0
      %p184 = por %p182, %p183
      %p185 = scmp.ne.s32.totalorder %s171, %s172
      %p186 = scmp.eq.s32.totalorder %s22, 5
      %p187 = por %p185, %p186
      %p189 = scmp.ne.s32.totalorder %s172, %s188
      %p190 = scmp.eq.s32.totalorder %s22, 0
      %p191 = por %p189, %p190
      %s192 = sadd.s32 %s24, 1
      %s193 = smul.u32 %s192, 16
      %p194 = scmp.lt.s32.totalorder %s193, 37
      %s195 = scalar_select %p194, %s193, 37
      %s196 = sadd.s32 %s31, 1
      %s197 = smul.u32 %s196, 16
      %p198 = scmp.lt.s32.totalorder %s197, 37
      %s199 = scalar_select %p198, %s197, 37
      %s200 = ssub.s32 %s23, %s35
      %s201 = ssub.s32 %s195, %s199
      %s202 = sor.u32 %s200, %s201
      %p203 = scmp.eq.s32.totalorder %s202, 0
      %s205 = sadd.s32 %s204, 1
      %s206 = scalar_select %p203, %s204, %s205
      %p209 = pneg %p203
      %p210 = scmp.eq.s32.totalorder %s16, 5
      %p211 = por %p209, %p210
      %p212 = scmp.ne.s32.totalorder %s204, %s207
      %p213 = scmp.eq.s32.totalorder %s16, 0
      %p214 = por %p212, %p213
      %p215 = scmp.ne.s32.totalorder %s204, %s207
      %p216 = scmp.eq.s32.totalorder %s21, 5
      %p217 = por %p215, %p216
      %p218 = scmp.ne.s32.totalorder %s207, %s208
      %p219 = scmp.eq.s32.totalorder %s21, 0
      %p220 = por %p218, %p219
      %p221 = scmp.ne.s32.totalorder %s207, %s208
      %p222 = scmp.eq.s32.totalorder %s22, 5
      %p223 = por %p221, %p222
      %p225 = scmp.ne.s32.totalorder %s208, %s224
      %p226 = scmp.eq.s32.totalorder %s22, 0
      %p227 = por %p225, %p226
      %s229 = sadd.s32 %s228, 1
      %p232 = scmp.eq.s32.totalorder %s16, 5
      %p233 = scmp.ne.s32.totalorder %s228, %s230
      %p234 = scmp.eq.s32.totalorder %s16, 0
      %p235 = por %p233, %p234
      %p236 = scmp.ne.s32.totalorder %s228, %s230
      %p237 = scmp.eq.s32.totalorder %s21, 5
      %p238 = por %p236, %p237
      %p239 = scmp.ne.s32.totalorder %s230, %s231
      %p240 = scmp.eq.s32.totalorder %s21, 0
      %p241 = por %p239, %p240
      %p242 = scmp.ne.s32.totalorder %s230, %s231
      %p243 = scmp.eq.s32.totalorder %s22, 5
      %p244 = por %p242, %p243
      %p246 = scmp.ne.s32.totalorder %s231, %s245
      %p247 = scmp.eq.s32.totalorder %s22, 0
      %p248 = por %p246, %p247
      %s249 = ssub.s32 %s23, %s35
      %s250 = ssub.s32 %s24, %s31
      %s251 = sor.u32 %s249, %s250
      %p252 = scmp.eq.s32.totalorder %s251, 0
      %s254 = sadd.s32 %s253, 1
      %s255 = scalar_select %p252, %s253, %s254
      %p258 = pneg %p252
      %p259 = scmp.eq.s32.totalorder %s16, 5
      %p260 = por %p258, %p259
      %p261 = scmp.ne.s32.totalorder %s253, %s256
      %p262 = scmp.eq.s32.totalorder %s16, 0
      %p263 = por %p261, %p262
      %p264 = scmp.ne.s32.totalorder %s253, %s256
      %p265 = scmp.eq.s32.totalorder %s21, 5
      %p266 = por %p264, %p265
      %p267 = scmp.ne.s32.totalorder %s256, %s257
      %p268 = scmp.eq.s32.totalorder %s21, 0
      %p269 = por %p267, %p268
      %p270 = scmp.ne.s32.totalorder %s256, %s257
      %p271 = scmp.eq.s32.totalorder %s22, 5
      %p272 = por %p270, %p271
      %p274 = scmp.ne.s32.totalorder %s257, %s273
      %p275 = scmp.eq.s32.totalorder %s22, 0
      %p276 = por %p274, %p275
      %p277 = scmp.le.s32.totalorder 1, %s16
      %p278 = scmp.lt.s32.totalorder %s16, 7
      %p279 = pnand %p277, %p278
      %p280 = pneg %p279
      // Predicated region
      $region9: #{tpu_custom_call.1} parent=5 // pred_check
        _
      $region10: #{tpu_custom_call.1} parent=5 // pred_check_branch
        %282 = sbr.rel (%p279) target = $region12
      $region11: #{tpu_custom_call.1} parent=5 // pred_region
        %s283 = ssub.s32 %s16, 1
        // Predicated region
        $region13: #{tpu_custom_call.1} parent=11 // pred_check
          %p284 = pneg %p241
        $region14: #{tpu_custom_call.1} parent=11 // pred_check_branch
          %286 = sbr.rel (%p284) target = $region16
        $region15: #{tpu_custom_call.1} parent=11 // pred_region
          _
        $region16: #{tpu_custom_call.1} parent=11 // pred_fallthru
          _
      $region12: #{tpu_custom_call.1} parent=5 // pred_fallthru
        _
      %p287 = scmp.lt.s32.totalorder %s16, 6
      // Predicated region
      $region17: #{tpu_custom_call.1} parent=5 // pred_check
        %p288 = pneg %p287
      $region18: #{tpu_custom_call.1} parent=5 // pred_check_branch
        %290 = sbr.rel (%p288) target = $region20
      $region19: #{tpu_custom_call.1} parent=5 // pred_region
        // Predicated region
        $region21: #{tpu_custom_call.1} parent=19 // pred_check
          %p291 = pneg %p50
        $region22: #{tpu_custom_call.1} parent=19 // pred_check_branch
          %293 = sbr.rel (%p291) target = $region24
        $region23: #{tpu_custom_call.1} parent=19 // pred_region
          %s294 = smul.u32 16, %s24
          %s295 = ssub.s32 38, %s294
          %p296 = scmp.lt.s32.totalorder %s295, 16
          %s297 = scalar_select %p296, %s295, 16
          %s298 = smul.u32 128, %s297
          %p299 = scmp.lt.s32.totalorder %s23, 1
          %s300 = scalar_select %p299, %s23, 1
          %p301 = scmp.lt.s32.totalorder %s294, 37
          %s302 = scalar_select %p301, %s294, 37
          %s303 = smul.addr %s300, 38
          %s304 = sadd.s32 %s302, %s303
          %s305 = smul.addr %s304, 8
          %s306 = scalar_lea.vmem %s0, %s305
          %s307 = smul.u32 16, %s24
          %s308 = ssub.s32 38, %s307
          %p309 = scmp.lt.s32.totalorder %s308, 16
          %s310 = scalar_select %p309, %s308, 16
          %s311 = smul.u32 128, %s310
        $region24: #{tpu_custom_call.1} parent=19 // pred_fallthru
          _
        // Predicated region
        $region25: #{tpu_custom_call.1} parent=19 // pred_check
          %p312 = pneg %p86
        $region26: #{tpu_custom_call.1} parent=19 // pred_check_branch
          %314 = sbr.rel (%p312) target = $region28
        $region27: #{tpu_custom_call.1} parent=19 // pred_region
          %s315 = sadd.s32 %s24, 1
          %s316 = smul.u32 %s315, 16
          %p317 = scmp.lt.s32.totalorder %s316, 37
          %s318 = scalar_select %p317, %s316, 37
          %p319 = scmp.lt.s32.totalorder %s23, 1
          %s320 = scalar_select %p319, %s23, 1
          %p321 = scmp.lt.s32.totalorder %s318, 37
          %s322 = scalar_select %p321, %s318, 37
          %s323 = smul.addr %s320, 38
          %s324 = sadd.s32 %s322, %s323
          %s325 = smul.addr %s324, 8
          %s326 = scalar_lea.vmem %s1, %s325
          %s327 = sadd.s32 %s24, 1
          %s328 = smul.u32 %s327, 16
          %p329 = scmp.lt.s32.totalorder %s328, 37
          %s330 = scalar_select %p329, %s328, 37
        $region28: #{tpu_custom_call.1} parent=19 // pred_fallthru
          _
        // Predicated region
        $region29: #{tpu_custom_call.1} parent=19 // pred_check
          %p331 = pneg %p114
        $region30: #{tpu_custom_call.1} parent=19 // pred_check_branch
          %333 = sbr.rel (%p331) target = $region32
        $region31: #{tpu_custom_call.1} parent=19 // pred_region
          %s334 = smul.u32 16, %s24
          %s335 = ssub.s32 38, %s334
          %p336 = scmp.lt.s32.totalorder %s335, 16
          %s337 = scalar_select %p336, %s335, 16
          %s338 = smul.u32 128, %s337
          %p339 = scmp.lt.s32.totalorder %s23, 1
          %s340 = scalar_select %p339, %s23, 1
          %p341 = scmp.lt.s32.totalorder %s334, 37
          %s342 = scalar_select %p341, %s334, 37
          %s343 = smul.addr %s340, 38
          %s344 = sadd.s32 %s342, %s343
          %s345 = smul.addr %s344, 8
          %s346 = scalar_lea.vmem %s2, %s345
          %s347 = smul.u32 16, %s24
          %s348 = ssub.s32 38, %s347
          %p349 = scmp.lt.s32.totalorder %s348, 16
          %s350 = scalar_select %p349, %s348, 16
          %s351 = smul.u32 128, %s350
        $region32: #{tpu_custom_call.1} parent=19 // pred_fallthru
          _
        // Predicated region
        $region33: #{tpu_custom_call.1} parent=19 // pred_check
          %p352 = pneg %p150
        $region34: #{tpu_custom_call.1} parent=19 // pred_check_branch
          %354 = sbr.rel (%p352) target = $region36
        $region35: #{tpu_custom_call.1} parent=19 // pred_region
          %s355 = sadd.s32 %s24, 1
          %s356 = smul.u32 %s355, 16
          %p357 = scmp.lt.s32.totalorder %s356, 37
          %s358 = scalar_select %p357, %s356, 37
          %p359 = scmp.lt.s32.totalorder %s23, 1
          %s360 = scalar_select %p359, %s23, 1
          %p361 = scmp.lt.s32.totalorder %s358, 37
          %s362 = scalar_select %p361, %s358, 37
          %s363 = smul.addr %s360, 38
          %s364 = sadd.s32 %s362, %s363
          %s365 = smul.addr %s364, 8
          %s366 = scalar_lea.vmem %s3, %s365
          %s367 = sadd.s32 %s24, 1
          %s368 = smul.u32 %s367, 16
          %p369 = scmp.lt.s32.totalorder %s368, 37
          %s370 = scalar_select %p369, %s368, 37
        $region36: #{tpu_custom_call.1} parent=19 // pred_fallthru
          _
        // Predicated region
        $region37: #{tpu_custom_call.1} parent=19 // pred_check
          %p371 = pneg %p178
        $region38: #{tpu_custom_call.1} parent=19 // pred_check_branch
          %373 = sbr.rel (%p371) target = $region40
        $region39: #{tpu_custom_call.1} parent=19 // pred_region
          %s374 = smul.u32 16, %s24
          %s375 = ssub.s32 38, %s374
          %p376 = scmp.lt.s32.totalorder %s375, 16
          %s377 = scalar_select %p376, %s375, 16
          %s378 = smul.u32 128, %s377
          %p379 = scmp.lt.s32.totalorder %s23, 1
          %s380 = scalar_select %p379, %s23, 1
          %p381 = scmp.lt.s32.totalorder %s374, 37
          %s382 = scalar_select %p381, %s374, 37
          %s383 = smul.addr %s380, 38
          %s384 = sadd.s32 %s382, %s383
          %s385 = smul.addr %s384, 8
          %s386 = scalar_lea.vmem %s4, %s385
          %s387 = smul.u32 16, %s24
          %s388 = ssub.s32 38, %s387
          %p389 = scmp.lt.s32.totalorder %s388, 16
          %s390 = scalar_select %p389, %s388, 16
          %s391 = smul.u32 128, %s390
        $region40: #{tpu_custom_call.1} parent=19 // pred_fallthru
          _
        // Predicated region
        $region41: #{tpu_custom_call.1} parent=19 // pred_check
          %p392 = pneg %p214
        $region42: #{tpu_custom_call.1} parent=19 // pred_check_branch
          %394 = sbr.rel (%p392) target = $region44
        $region43: #{tpu_custom_call.1} parent=19 // pred_region
          %s395 = sadd.s32 %s24, 1
          %s396 = smul.u32 %s395, 16
          %p397 = scmp.lt.s32.totalorder %s396, 37
          %s398 = scalar_select %p397, %s396, 37
          %p399 = scmp.lt.s32.totalorder %s23, 1
          %s400 = scalar_select %p399, %s23, 1
          %p401 = scmp.lt.s32.totalorder %s398, 37
          %s402 = scalar_select %p401, %s398, 37
          %s403 = smul.addr %s400, 38
          %s404 = sadd.s32 %s402, %s403
          %s405 = smul.addr %s404, 8
          %s406 = scalar_lea.vmem %s5, %s405
          %s407 = sadd.s32 %s24, 1
          %s408 = smul.u32 %s407, 16
          %p409 = scmp.lt.s32.totalorder %s408, 37
          %s410 = scalar_select %p409, %s408, 37
        $region44: #{tpu_custom_call.1} parent=19 // pred_fallthru
          _
      $region20: #{tpu_custom_call.1} parent=5 // pred_fallthru
        _
      %p411 = scmp.le.s32.totalorder 1, %s16
      %p412 = scmp.lt.s32.totalorder %s16, 7
      %p413 = pnand %p411, %p412
      %p414 = pneg %p413
      // Predicated region
      $region45: #{tpu_custom_call.1} parent=5 // pred_check
        _
      $region46: #{tpu_custom_call.1} parent=5 // pred_check_branch
        %416 = sbr.rel (%p413) target = $region48
      $region47: #{tpu_custom_call.1} parent=5 // pred_region
        %s417 = ssub.s32 %s16, 1
        %s418 = smul.u32 16, %s26
        %s419 = ssub.s32 38, %s418
        %p420 = scmp.lt.s32.totalorder %s419, 16
        %s421 = scalar_select %p420, %s419, 16
        %s422 = smul.u32 128, %s421
        %p423 = scmp.lt.s32.totalorder %s25, 1
        %s424 = scalar_select %p423, %s25, 1
        %p425 = scmp.lt.s32.totalorder %s418, 37
        %s426 = scalar_select %p425, %s418, 37
        %s427 = smul.addr %s424, 38
        %s428 = sadd.s32 %s426, %s427
        %s429 = smul.addr %s428, 8
        %s430 = scalar_lea.vmem %s0, %s429
        %p431 = pneg %p56
        %p432 = pneg %p53
        %s433 = sadd.s32 %s26, 1
        %s434 = smul.u32 %s433, 16
        %p435 = scmp.lt.s32.totalorder %s434, 37
        %s436 = scalar_select %p435, %s434, 37
        %p437 = scmp.lt.s32.totalorder %s25, 1
        %s438 = scalar_select %p437, %s25, 1
        %p439 = scmp.lt.s32.totalorder %s436, 37
        %s440 = scalar_select %p439, %s436, 37
        %s441 = smul.addr %s438, 38
        %s442 = sadd.s32 %s440, %s441
        %s443 = smul.addr %s442, 8
        %s444 = scalar_lea.vmem %s1, %s443
        %p445 = pneg %p92
        %p446 = pneg %p89
        %s447 = smul.u32 16, %s26
        %s448 = ssub.s32 38, %s447
        %p449 = scmp.lt.s32.totalorder %s448, 16
        %s450 = scalar_select %p449, %s448, 16
        %s451 = smul.u32 128, %s450
        %p452 = scmp.lt.s32.totalorder %s25, 1
        %s453 = scalar_select %p452, %s25, 1
        %p454 = scmp.lt.s32.totalorder %s447, 37
        %s455 = scalar_select %p454, %s447, 37
        %s456 = smul.addr %s453, 38
        %s457 = sadd.s32 %s455, %s456
        %s458 = smul.addr %s457, 8
        %s459 = scalar_lea.vmem %s2, %s458
        %p460 = pneg %p120
        %p461 = pneg %p117
        %s462 = sadd.s32 %s26, 1
        %s463 = smul.u32 %s462, 16
        %p464 = scmp.lt.s32.totalorder %s463, 37
        %s465 = scalar_select %p464, %s463, 37
        %p466 = scmp.lt.s32.totalorder %s25, 1
        %s467 = scalar_select %p466, %s25, 1
        %p468 = scmp.lt.s32.totalorder %s465, 37
        %s469 = scalar_select %p468, %s465, 37
        %s470 = smul.addr %s467, 38
        %s471 = sadd.s32 %s469, %s470
        %s472 = smul.addr %s471, 8
        %s473 = scalar_lea.vmem %s3, %s472
        %p474 = pneg %p156
        %p475 = pneg %p153
        %s476 = smul.u32 16, %s26
        %s477 = ssub.s32 38, %s476
        %p478 = scmp.lt.s32.totalorder %s477, 16
        %s479 = scalar_select %p478, %s477, 16
        %s480 = smul.u32 128, %s479
        %p481 = scmp.lt.s32.totalorder %s25, 1
        %s482 = scalar_select %p481, %s25, 1
        %p483 = scmp.lt.s32.totalorder %s476, 37
        %s484 = scalar_select %p483, %s476, 37
        %s485 = smul.addr %s482, 38
        %s486 = sadd.s32 %s484, %s485
        %s487 = smul.addr %s486, 8
        %s488 = scalar_lea.vmem %s4, %s487
        %p489 = pneg %p184
        %p490 = pneg %p181
        %s491 = sadd.s32 %s26, 1
        %s492 = smul.u32 %s491, 16
        %p493 = scmp.lt.s32.totalorder %s492, 37
        %s494 = scalar_select %p493, %s492, 37
        %p495 = scmp.lt.s32.totalorder %s25, 1
        %s496 = scalar_select %p495, %s25, 1
        %p497 = scmp.lt.s32.totalorder %s494, 37
        %s498 = scalar_select %p497, %s494, 37
        %s499 = smul.addr %s496, 38
        %s500 = sadd.s32 %s498, %s499
        %s501 = smul.addr %s500, 8
        %s502 = scalar_lea.vmem %s5, %s501
        %p503 = pneg %p220
        %p504 = pneg %p217
        %p505 = pneg %p241
        %p506 = pneg %p238
        %p507 = pneg %p269
        %p508 = pneg %p266
        %s509 = sand.u32 %s256, 1
        %s510 = scalar_lea.sflag [#allocation3], %s509
        %s511 = sand.u32 %s256, 1
        %s512 = smul.addr %s511, 128
        %s513 = scalar_lea.vmem [#allocation2], %s512
        %s514 = smul.u32 16, %s26
        %s515 = ssub.s32 38, %s514
        %p516 = scmp.lt.s32.totalorder %s515, 16
        %s517 = scalar_select %p516, %s515, 16
        %s518 = smul.u32 128, %s517
        %p519 = scmp.lt.s32.totalorder %s25, 1
        %s520 = scalar_select %p519, %s25, 1
        %p521 = scmp.lt.s32.totalorder %s514, 37
        %s522 = scalar_select %p521, %s514, 37
        %s523 = smul.addr %s520, 38
        %s524 = sadd.s32 %s522, %s523
        %s525 = smul.addr %s524, 8
        %s526 = scalar_lea.vmem %s0, %s525
        %s527 = smul.u32 16, %s26
        %s528 = ssub.s32 38, %s527
        %p529 = scmp.lt.s32.totalorder %s528, 16
        %s530 = scalar_select %p529, %s528, 16
        %s531 = smul.u32 128, %s530
        %s532 = sadd.s32 %s26, 1
        %s533 = smul.u32 %s532, 16
        %p534 = scmp.lt.s32.totalorder %s533, 37
        %s535 = scalar_select %p534, %s533, 37
        %p536 = scmp.lt.s32.totalorder %s25, 1
        %s537 = scalar_select %p536, %s25, 1
        %p538 = scmp.lt.s32.totalorder %s535, 37
        %s539 = scalar_select %p538, %s535, 37
        %s540 = smul.addr %s537, 38
        %s541 = sadd.s32 %s539, %s540
        %s542 = smul.addr %s541, 8
        %s543 = scalar_lea.vmem %s1, %s542
        %s544 = sadd.s32 %s26, 1
        %s545 = smul.u32 %s544, 16
        %p546 = scmp.lt.s32.totalorder %s545, 37
        %s547 = scalar_select %p546, %s545, 37
        %s548 = smul.u32 16, %s26
        %s549 = ssub.s32 38, %s548
        %p550 = scmp.lt.s32.totalorder %s549, 16
        %s551 = scalar_select %p550, %s549, 16
        %s552 = smul.u32 128, %s551
        %p553 = scmp.lt.s32.totalorder %s25, 1
        %s554 = scalar_select %p553, %s25, 1
        %p555 = scmp.lt.s32.totalorder %s548, 37
        %s556 = scalar_select %p555, %s548, 37
        %s557 = smul.addr %s554, 38
        %s558 = sadd.s32 %s556, %s557
        %s559 = smul.addr %s558, 8
        %s560 = scalar_lea.vmem %s2, %s559
        %s561 = smul.u32 16, %s26
        %s562 = ssub.s32 38, %s561
        %p563 = scmp.lt.s32.totalorder %s562, 16
        %s564 = scalar_select %p563, %s562, 16
        %s565 = smul.u32 128, %s564
        %s566 = sadd.s32 %s26, 1
        %s567 = smul.u32 %s566, 16
        %p568 = scmp.lt.s32.totalorder %s567, 37
        %s569 = scalar_select %p568, %s567, 37
        %p570 = scmp.lt.s32.totalorder %s25, 1
        %s571 = scalar_select %p570, %s25, 1
        %p572 = scmp.lt.s32.totalorder %s569, 37
        %s573 = scalar_select %p572, %s569, 37
        %s574 = smul.addr %s571, 38
        %s575 = sadd.s32 %s573, %s574
        %s576 = smul.addr %s575, 8
        %s577 = scalar_lea.vmem %s3, %s576
        %s578 = sadd.s32 %s26, 1
        %s579 = smul.u32 %s578, 16
        %p580 = scmp.lt.s32.totalorder %s579, 37
        %s581 = scalar_select %p580, %s579, 37
        %s582 = smul.u32 16, %s26
        %s583 = ssub.s32 38, %s582
        %p584 = scmp.lt.s32.totalorder %s583, 16
        %s585 = scalar_select %p584, %s583, 16
        %s586 = smul.u32 128, %s585
        %p587 = scmp.lt.s32.totalorder %s25, 1
        %s588 = scalar_select %p587, %s25, 1
        %p589 = scmp.lt.s32.totalorder %s582, 37
        %s590 = scalar_select %p589, %s582, 37
        %s591 = smul.addr %s588, 38
        %s592 = sadd.s32 %s590, %s591
        %s593 = smul.addr %s592, 8
        %s594 = scalar_lea.vmem %s4, %s593
        %s595 = smul.u32 16, %s26
        %s596 = ssub.s32 38, %s595
        %p597 = scmp.lt.s32.totalorder %s596, 16
        %s598 = scalar_select %p597, %s596, 16
        %s599 = smul.u32 128, %s598
        %s600 = sadd.s32 %s26, 1
        %s601 = smul.u32 %s600, 16
        %p602 = scmp.lt.s32.totalorder %s601, 37
        %s603 = scalar_select %p602, %s601, 37
        %p604 = scmp.lt.s32.totalorder %s25, 1
        %s605 = scalar_select %p604, %s25, 1
        %p606 = scmp.lt.s32.totalorder %s603, 37
        %s607 = scalar_select %p606, %s603, 37
        %s608 = smul.addr %s605, 38
        %s609 = sadd.s32 %s607, %s608
        %s610 = smul.addr %s609, 8
        %s611 = scalar_lea.vmem %s5, %s610
        %s612 = sadd.s32 %s26, 1
        %s613 = smul.u32 %s612, 16
        %p614 = scmp.lt.s32.totalorder %s613, 37
        %s615 = scalar_select %p614, %s613, 37
        %s616 = smul.u32 16, %s26
        %v618 = vld [vmem:[%s6] sm:$0xf]
        %v619 = vld [vmem:[%s6 + $0x4] sm:$0xf]
        %v620 = vld [vmem:[%s6 + $0x8] sm:$0xf]
        %v621 = vld [vmem:[%s6 + $0xc] sm:$0xf]
        %s622 = scalar_lea.vmem %s6, 16
        %v623 = vld [vmem:[%s622] sm:$0xf]
        %v624 = vld [vmem:[%s622 + $0x4] sm:$0xf]
        %v625 = vld [vmem:[%s622 + $0x8] sm:$0xf]
        %v626 = vld [vmem:[%s622 + $0xc] sm:$0xf]
        %v627 = vld [vmem:[%s560] sm:$0xff]
        %v628 = vld [vmem:[%s560 + $0x8] sm:$0xff]
        %v629 = vld [vmem:[%s560 + $0x10] sm:$0xff]
        %v630 = vld [vmem:[%s560 + $0x18] sm:$0xff]
        %v631 = vld [vmem:[%s560 + $0x20] sm:$0xff]
        %v632 = vld [vmem:[%s560 + $0x28] sm:$0xff]
        %v633 = vld [vmem:[%s560 + $0x30] sm:$0xff]
        %v634 = vld [vmem:[%s560 + $0x38] sm:$0xff]
        %v635 = vld [vmem:[%s560 + $0x40] sm:$0xff]
        %v636 = vld [vmem:[%s560 + $0x48] sm:$0xff]
        %v637 = vld [vmem:[%s560 + $0x50] sm:$0xff]
        %v638 = vld [vmem:[%s560 + $0x58] sm:$0xff]
        %v639 = vld [vmem:[%s560 + $0x60] sm:$0xff]
        %v640 = vld [vmem:[%s560 + $0x68] sm:$0xff]
        %v641 = vld [vmem:[%s560 + $0x70] sm:$0xff]
        %v642 = vld [vmem:[%s560 + $0x78] sm:$0xff]
        %v643 = vld [vmem:[%s577] sm:$0xff]
        %v644 = vpack.c.bf16 %v628, %v627
        %v645 = vpack.c.bf16 %v630, %v629
        %v646 = vpack.c.bf16 %v632, %v631
        %v647 = vpack.c.bf16 %v634, %v633
        %v648 = vpack.c.bf16 %v636, %v635
        %v649 = vpack.c.bf16 %v638, %v637
        %v650 = vpack.c.bf16 %v640, %v639
        %v651 = vpack.c.bf16 %v642, %v641
        %v652 = vpack.c.bf16 %v643, %v643
        %vm653 = vsmask.f32 7424
        %v655 = vshrl.u32 %v644, 16
        %v657 = vshll.u32 %v644, 16
        %v659 = vrot.slane %v657, 1
        %v660 = vor.u32 %v655, %v659
        %v662 = vshll.u32 %v645, 16
        %v664 = vrot.slane %v662, 1
        %v665 = vsel %vm653, %v660, %v664
        %v666 = vshrl.u32 %v645, 16
        %v668 = vor.u32 %v666, %v664
        %v670 = vshll.u32 %v646, 16
        %v672 = vrot.slane %v670, 1
        %v673 = vsel %vm653, %v668, %v672
        %v674 = vshrl.u32 %v646, 16
        %v676 = vor.u32 %v674, %v672
        %v678 = vshll.u32 %v647, 16
        %v680 = vrot.slane %v678, 1
        %v681 = vsel %vm653, %v676, %v680
        %v682 = vshrl.u32 %v647, 16
        %v684 = vor.u32 %v682, %v680
        %v686 = vshll.u32 %v648, 16
        %v688 = vrot.slane %v686, 1
        %v689 = vsel %vm653, %v684, %v688
        %v690 = vshrl.u32 %v648, 16
        %v692 = vor.u32 %v690, %v688
        %v694 = vshll.u32 %v649, 16
        %v696 = vrot.slane %v694, 1
        %v697 = vsel %vm653, %v692, %v696
        %v698 = vshrl.u32 %v649, 16
        %v700 = vor.u32 %v698, %v696
        %v702 = vshll.u32 %v650, 16
        %v704 = vrot.slane %v702, 1
        %v705 = vsel %vm653, %v700, %v704
        %v706 = vshrl.u32 %v650, 16
        %v708 = vor.u32 %v706, %v704
        %v710 = vshll.u32 %v651, 16
        %v712 = vrot.slane %v710, 1
        %v713 = vsel %vm653, %v708, %v712
        %v714 = vshrl.u32 %v651, 16
        %v716 = vor.u32 %v714, %v712
        %v718 = vshll.u32 %v652, 16
        %v720 = vrot.slane %v718, 1
        %v721 = vsel %vm653, %v716, %v720
        %v726 = vunpack.c.l.b16 %v623
        %v727 = vunpack.c.l.b16 %v624
        %v728 = vunpack.c.l.b16 %v625
        %v729 = vunpack.c.l.b16 %v626
        %v730 = vpack.c.b16 %v727, %v726
        %v731 = vpack.c.b16 %v729, %v728
        %vm734 = vcmask 261120
        %v736 = vsel %vm734, %v665, 0
        %v739 = vsel %vm734, %v673, 0
        %v742 = vsel %vm734, %v681, 0
        %v745 = vsel %vm734, %v689, 0
        %v748 = vsel %vm734, %v697, 0
        %v751 = vsel %vm734, %v705, 0
        %v754 = vsel %vm734, %v713, 0
        %v757 = vsel %vm734, %v721, 0
        %759 = vmatprep.subr.bf16.mxu0 0
        %760 = vmatpush1.bf16.msra.mxu0 0
        %761 = vmatprep.subr.bf16.mxu0 0
        %762 = vmatpush1.bf16.msra.mxu0 0
        %763 = vmatprep.subr.bf16.mxu0 0
        %764 = vmatpush1.bf16.msra.mxu0 0
        %765 = vmatprep.subr.bf16.mxu0 0
        %766 = vmatpush1.bf16.msra.mxu0 0
        %767 = vmatprep.subr.bf16.mxu0 0
        %768 = vmatpush1.bf16.msra.mxu0 0
        %769 = vmatprep.subr.bf16.mxu0 0
        %770 = vmatpush1.bf16.msra.mxu0 0
        %771 = vmatprep.subr.bf16.mxu0 0
        %772 = vmatpush1.bf16.msra.mxu0 %v731
        %773 = vmatprep.subr.bf16.mxu0 0
        %774 = vmatpush1.bf16.msra.mxu0 %v730
        %775 = vmatprep.subr.bf16.mxu0 0
        %776 = vmatpush2.bf16.msra.mxu0 0
        %777 = vmatprep.subr.bf16.mxu0 0
        %778 = vmatpush2.bf16.msra.mxu0 0
        %779 = vmatprep.subr.bf16.mxu0 0
        %780 = vmatpush2.bf16.msra.mxu0 0
        %781 = vmatprep.subr.bf16.mxu0 0
        %782 = vmatpush2.bf16.msra.mxu0 0
        %783 = vmatprep.subr.bf16.mxu0 0
        %784 = vmatpush2.bf16.msra.mxu0 0
        %785 = vmatprep.subr.bf16.mxu0 0
        %786 = vmatpush2.bf16.msra.mxu0 0
        %787 = vmatprep.subr.bf16.mxu0 0
        %788 = vmatpush2.bf16.msra.mxu0 0
        %789 = vmatprep.subr.bf16.mxu0 0
        %790 = vmatpush2.bf16.msra.mxu0 0
        %791 = vmatprep.mubr.bf16.mxu0 0
        %792 = vmatmul.mubr.bf16.gmra.mxu0 %v736
        %v793 = vpop.f32.mrf.mxu0
        %v794 = vadd.f32 0.0, %v793
        %v795 = vpop.f32.mrf.mxu0
        %v796 = vpop.f32.mrf.mxu0
        %v797 = vadd.f32 0.0, %v796
        %v798 = vpop.f32.mrf.mxu0
        %799 = vmatprep.mubr.bf16.mxu0 0
        %800 = vmatmul.mubr.bf16.gmra.mxu0 %v739
        %v801 = vpop.f32.mrf.mxu0
        %v802 = vadd.f32 0.0, %v801
        %v803 = vpop.f32.mrf.mxu0
        %v804 = vpop.f32.mrf.mxu0
        %v805 = vadd.f32 0.0, %v804
        %v806 = vpop.f32.mrf.mxu0
        %807 = vmatprep.mubr.bf16.mxu0 0
        %808 = vmatmul.mubr.bf16.gmra.mxu0 %v742
        %v809 = vpop.f32.mrf.mxu0
        %v810 = vadd.f32 0.0, %v809
        %v811 = vpop.f32.mrf.mxu0
        %v812 = vpop.f32.mrf.mxu0
        %v813 = vadd.f32 0.0, %v812
        %v814 = vpop.f32.mrf.mxu0
        %815 = vmatprep.mubr.bf16.mxu0 0
        %816 = vmatmul.mubr.bf16.gmra.mxu0 %v745
        %v817 = vpop.f32.mrf.mxu0
        %v818 = vadd.f32 0.0, %v817
        %v819 = vpop.f32.mrf.mxu0
        %v820 = vpop.f32.mrf.mxu0
        %v821 = vadd.f32 0.0, %v820
        %v822 = vpop.f32.mrf.mxu0
        %823 = vmatprep.mubr.bf16.mxu0 0
        %824 = vmatmul.mubr.bf16.gmra.mxu0 %v748
        %v825 = vpop.f32.mrf.mxu0
        %v826 = vadd.f32 0.0, %v825
        %v827 = vpop.f32.mrf.mxu0
        %v828 = vpop.f32.mrf.mxu0
        %v829 = vadd.f32 0.0, %v828
        %v830 = vpop.f32.mrf.mxu0
        %831 = vmatprep.mubr.bf16.mxu0 0
        %832 = vmatmul.mubr.bf16.gmra.mxu0 %v751
        %v833 = vpop.f32.mrf.mxu0
        %v834 = vadd.f32 0.0, %v833
        %v835 = vpop.f32.mrf.mxu0
        %v836 = vpop.f32.mrf.mxu0
        %v837 = vadd.f32 0.0, %v836
        %v838 = vpop.f32.mrf.mxu0
        %839 = vmatprep.mubr.bf16.mxu0 0
        %840 = vmatmul.mubr.bf16.gmra.mxu0 %v754
        %v841 = vpop.f32.mrf.mxu0
        %v842 = vadd.f32 0.0, %v841
        %v843 = vpop.f32.mrf.mxu0
        %v844 = vpop.f32.mrf.mxu0
        %v845 = vadd.f32 0.0, %v844
        %v846 = vpop.f32.mrf.mxu0
        %847 = vmatprep.mubr.bf16.mxu0 0
        %848 = vmatmul.mubr.bf16.gmra.mxu0 %v757
        %v849 = vpop.f32.mrf.mxu0
        %v850 = vadd.f32 0.0, %v849
        %v851 = vpop.f32.mrf.mxu0
        %v852 = vpop.f32.mrf.mxu0
        %v853 = vadd.f32 0.0, %v852
        %v854 = vpop.f32.mrf.mxu0
        %855 = vdwg.mxu0
        %v860 = vunpack.c.l.b16 %v618
        %v861 = vunpack.c.l.b16 %v619
        %v862 = vunpack.c.l.b16 %v620
        %v863 = vunpack.c.l.b16 %v621
        %v864 = vpack.c.b16 %v861, %v860
        %v865 = vpack.c.b16 %v863, %v862
        %v868 = vsel %vm734, %v644, 0
        %v870 = vsel %vm734, %v645, 0
        %v872 = vsel %vm734, %v646, 0
        %v874 = vsel %vm734, %v647, 0
        %v876 = vsel %vm734, %v648, 0
        %v878 = vsel %vm734, %v649, 0
        %v880 = vsel %vm734, %v650, 0
        %v882 = vsel %vm734, %v651, 0
        %884 = vmatprep.subr.bf16.mxu0 0
        %885 = vmatpush1.bf16.msra.mxu0 0
        %886 = vmatprep.subr.bf16.mxu0 0
        %887 = vmatpush1.bf16.msra.mxu0 0
        %888 = vmatprep.subr.bf16.mxu0 0
        %889 = vmatpush1.bf16.msra.mxu0 0
        %890 = vmatprep.subr.bf16.mxu0 0
        %891 = vmatpush1.bf16.msra.mxu0 0
        %892 = vmatprep.subr.bf16.mxu0 0
        %893 = vmatpush1.bf16.msra.mxu0 0
        %894 = vmatprep.subr.bf16.mxu0 0
        %895 = vmatpush1.bf16.msra.mxu0 0
        %896 = vmatprep.subr.bf16.mxu0 0
        %897 = vmatpush1.bf16.msra.mxu0 %v865
        %898 = vmatprep.subr.bf16.mxu0 0
        %899 = vmatpush1.bf16.msra.mxu0 %v864
        %900 = vmatprep.subr.bf16.mxu0 0
        %901 = vmatpush2.bf16.msra.mxu0 0
        %902 = vmatprep.subr.bf16.mxu0 0
        %903 = vmatpush2.bf16.msra.mxu0 0
        %904 = vmatprep.subr.bf16.mxu0 0
        %905 = vmatpush2.bf16.msra.mxu0 0
        %906 = vmatprep.subr.bf16.mxu0 0
        %907 = vmatpush2.bf16.msra.mxu0 0
        %908 = vmatprep.subr.bf16.mxu0 0
        %909 = vmatpush2.bf16.msra.mxu0 0
        %910 = vmatprep.subr.bf16.mxu0 0
        %911 = vmatpush2.bf16.msra.mxu0 0
        %912 = vmatprep.subr.bf16.mxu0 0
        %913 = vmatpush2.bf16.msra.mxu0 0
        %914 = vmatprep.subr.bf16.mxu0 0
        %915 = vmatpush2.bf16.msra.mxu0 0
        %916 = vmatprep.mubr.bf16.mxu0 0
        %917 = vmatmul.mubr.bf16.gmra.mxu0 %v868
        %v918 = vpop.f32.mrf.mxu0
        %v919 = vadd.f32 %v794, %v918
        %v920 = vpop.f32.mrf.mxu0
        %v921 = vpop.f32.mrf.mxu0
        %v922 = vadd.f32 %v797, %v921
        %v923 = vpop.f32.mrf.mxu0
        %924 = vmatprep.mubr.bf16.mxu0 0
        %925 = vmatmul.mubr.bf16.gmra.mxu0 %v870
        %v926 = vpop.f32.mrf.mxu0
        %v927 = vadd.f32 %v802, %v926
        %v928 = vpop.f32.mrf.mxu0
        %v929 = vpop.f32.mrf.mxu0
        %v930 = vadd.f32 %v805, %v929
        %v931 = vpop.f32.mrf.mxu0
        %932 = vmatprep.mubr.bf16.mxu0 0
        %933 = vmatmul.mubr.bf16.gmra.mxu0 %v872
        %v934 = vpop.f32.mrf.mxu0
        %v935 = vadd.f32 %v810, %v934
        %v936 = vpop.f32.mrf.mxu0
        %v937 = vpop.f32.mrf.mxu0
        %v938 = vadd.f32 %v813, %v937
        %v939 = vpop.f32.mrf.mxu0
        %940 = vmatprep.mubr.bf16.mxu0 0
        %941 = vmatmul.mubr.bf16.gmra.mxu0 %v874
        %v942 = vpop.f32.mrf.mxu0
        %v943 = vadd.f32 %v818, %v942
        %v944 = vpop.f32.mrf.mxu0
        %v945 = vpop.f32.mrf.mxu0
        %v946 = vadd.f32 %v821, %v945
        %v947 = vpop.f32.mrf.mxu0
        %948 = vmatprep.mubr.bf16.mxu0 0
        %949 = vmatmul.mubr.bf16.gmra.mxu0 %v876
        %v950 = vpop.f32.mrf.mxu0
        %v951 = vadd.f32 %v826, %v950
        %v952 = vpop.f32.mrf.mxu0
        %v953 = vpop.f32.mrf.mxu0
        %v954 = vadd.f32 %v829, %v953
        %v955 = vpop.f32.mrf.mxu0
        %956 = vmatprep.mubr.bf16.mxu0 0
        %957 = vmatmul.mubr.bf16.gmra.mxu0 %v878
        %v958 = vpop.f32.mrf.mxu0
        %v959 = vadd.f32 %v834, %v958
        %v960 = vpop.f32.mrf.mxu0
        %v961 = vpop.f32.mrf.mxu0
        %v962 = vadd.f32 %v837, %v961
        %v963 = vpop.f32.mrf.mxu0
        %964 = vmatprep.mubr.bf16.mxu0 0
        %965 = vmatmul.mubr.bf16.gmra.mxu0 %v880
        %v966 = vpop.f32.mrf.mxu0
        %v967 = vadd.f32 %v842, %v966
        %v968 = vpop.f32.mrf.mxu0
        %v969 = vpop.f32.mrf.mxu0
        %v970 = vadd.f32 %v845, %v969
        %v971 = vpop.f32.mrf.mxu0
        %972 = vmatprep.mubr.bf16.mxu0 0
        %973 = vmatmul.mubr.bf16.gmra.mxu0 %v882
        %v974 = vpop.f32.mrf.mxu0
        %v975 = vadd.f32 %v850, %v974
        %v976 = vpop.f32.mrf.mxu0
        %v977 = vpop.f32.mrf.mxu0
        %v978 = vadd.f32 %v853, %v977
        %v979 = vpop.f32.mrf.mxu0
        %980 = vdwg.mxu0
        %v981 = vmul.f32 %v919, %v919
        %v982 = vmul.f32 %v922, %v922
        %v983 = vmul.f32 %v927, %v927
        %v984 = vmul.f32 %v930, %v930
        %v985 = vmul.f32 %v935, %v935
        %v986 = vmul.f32 %v938, %v938
        %v987 = vmul.f32 %v943, %v943
        %v988 = vmul.f32 %v946, %v946
        %v989 = vmul.f32 %v951, %v951
        %v990 = vmul.f32 %v954, %v954
        %v991 = vmul.f32 %v959, %v959
        %v992 = vmul.f32 %v962, %v962
        %v993 = vmul.f32 %v967, %v967
        %v994 = vmul.f32 %v970, %v970
        %v995 = vmul.f32 %v975, %v975
        %v996 = vmul.f32 %v978, %v978
        %997 = vrot.lane.b32.xlu0 %v981, 64
        %v998 = vpop.permute.xlu0 %997
        %999 = vrot.lane.b32.xlu0 %v982, 64
        %v1000 = vpop.permute.xlu0 %999
        %1001 = vrot.lane.b32.xlu0 %v983, 64
        %v1002 = vpop.permute.xlu0 %1001
        %1003 = vrot.lane.b32.xlu0 %v984, 64
        %v1004 = vpop.permute.xlu0 %1003
        %1005 = vrot.lane.b32.xlu0 %v985, 64
        %v1006 = vpop.permute.xlu0 %1005
        %1007 = vrot.lane.b32.xlu0 %v986, 64
        %v1008 = vpop.permute.xlu0 %1007
        %1009 = vrot.lane.b32.xlu0 %v987, 64
        %v1010 = vpop.permute.xlu0 %1009
        %1011 = vrot.lane.b32.xlu0 %v988, 64
        %v1012 = vpop.permute.xlu0 %1011
        %1013 = vrot.lane.b32.xlu0 %v989, 64
        %v1014 = vpop.permute.xlu0 %1013
        %1015 = vrot.lane.b32.xlu0 %v990, 64
        %v1016 = vpop.permute.xlu0 %1015
        %1017 = vrot.lane.b32.xlu0 %v991, 64
        %v1018 = vpop.permute.xlu0 %1017
        %1019 = vrot.lane.b32.xlu0 %v992, 64
        %v1020 = vpop.permute.xlu0 %1019
        %1021 = vrot.lane.b32.xlu0 %v993, 64
        %v1022 = vpop.permute.xlu0 %1021
        %1023 = vrot.lane.b32.xlu0 %v994, 64
        %v1024 = vpop.permute.xlu0 %1023
        %1025 = vrot.lane.b32.xlu0 %v995, 64
        %v1026 = vpop.permute.xlu0 %1025
        %1027 = vrot.lane.b32.xlu0 %v996, 64
        %v1028 = vpop.permute.xlu0 %1027
        %v1029 = vadd.f32 %v981, %v998
        %v1030 = vadd.f32 %v982, %v1000
        %v1031 = vadd.f32 %v983, %v1002
        %v1032 = vadd.f32 %v984, %v1004
        %v1033 = vadd.f32 %v985, %v1006
        %v1034 = vadd.f32 %v986, %v1008
        %v1035 = vadd.f32 %v987, %v1010
        %v1036 = vadd.f32 %v988, %v1012
        %v1037 = vadd.f32 %v989, %v1014
        %v1038 = vadd.f32 %v990, %v1016
        %v1039 = vadd.f32 %v991, %v1018
        %v1040 = vadd.f32 %v992, %v1020
        %v1041 = vadd.f32 %v993, %v1022
        %v1042 = vadd.f32 %v994, %v1024
        %v1043 = vadd.f32 %v995, %v1026
        %v1044 = vadd.f32 %v996, %v1028
        %v1045 = vrsqrt.pop %v1029
        %v1046 = vmul.f32 %v1029, %v1045
        %vm1047 = vcmp.eq.f32.partialorder %v1029, inf
        %v1048 = vsel %vm1047, %v1029, %v1046
        %vm1049 = vcmp.eq.f32.partialorder %v1029, 0.0
        %v1050 = vand.u32 %v1029, 2147483648
        %v1051 = vsel %vm1049, %v1050, %v1048
        %v1052 = vrsqrt.pop %v1030
        %v1053 = vmul.f32 %v1030, %v1052
        %vm1054 = vcmp.eq.f32.partialorder %v1030, inf
        %v1055 = vsel %vm1054, %v1030, %v1053
        %vm1056 = vcmp.eq.f32.partialorder %v1030, 0.0
        %v1057 = vand.u32 %v1030, 2147483648
        %v1058 = vsel %vm1056, %v1057, %v1055
        %v1059 = vrsqrt.pop %v1031
        %v1060 = vmul.f32 %v1031, %v1059
        %vm1061 = vcmp.eq.f32.partialorder %v1031, inf
        %v1062 = vsel %vm1061, %v1031, %v1060
        %vm1063 = vcmp.eq.f32.partialorder %v1031, 0.0
        %v1064 = vand.u32 %v1031, 2147483648
        %v1065 = vsel %vm1063, %v1064, %v1062
        %v1066 = vrsqrt.pop %v1032
        %v1067 = vmul.f32 %v1032, %v1066
        %vm1068 = vcmp.eq.f32.partialorder %v1032, inf
        %v1069 = vsel %vm1068, %v1032, %v1067
        %vm1070 = vcmp.eq.f32.partialorder %v1032, 0.0
        %v1071 = vand.u32 %v1032, 2147483648
        %v1072 = vsel %vm1070, %v1071, %v1069
        %v1073 = vrsqrt.pop %v1033
        %v1074 = vmul.f32 %v1033, %v1073
        %vm1075 = vcmp.eq.f32.partialorder %v1033, inf
        %v1076 = vsel %vm1075, %v1033, %v1074
        %vm1077 = vcmp.eq.f32.partialorder %v1033, 0.0
        %v1078 = vand.u32 %v1033, 2147483648
        %v1079 = vsel %vm1077, %v1078, %v1076
        %v1080 = vrsqrt.pop %v1034
        %v1081 = vmul.f32 %v1034, %v1080
        %vm1082 = vcmp.eq.f32.partialorder %v1034, inf
        %v1083 = vsel %vm1082, %v1034, %v1081
        %vm1084 = vcmp.eq.f32.partialorder %v1034, 0.0
        %v1085 = vand.u32 %v1034, 2147483648
        %v1086 = vsel %vm1084, %v1085, %v1083
        %v1087 = vrsqrt.pop %v1035
        %v1088 = vmul.f32 %v1035, %v1087
        %vm1089 = vcmp.eq.f32.partialorder %v1035, inf
        %v1090 = vsel %vm1089, %v1035, %v1088
        %vm1091 = vcmp.eq.f32.partialorder %v1035, 0.0
        %v1092 = vand.u32 %v1035, 2147483648
        %v1093 = vsel %vm1091, %v1092, %v1090
        %v1094 = vrsqrt.pop %v1036
        %v1095 = vmul.f32 %v1036, %v1094
        %vm1096 = vcmp.eq.f32.partialorder %v1036, inf
        %v1097 = vsel %vm1096, %v1036, %v1095
        %vm1098 = vcmp.eq.f32.partialorder %v1036, 0.0
        %v1099 = vand.u32 %v1036, 2147483648
        %v1100 = vsel %vm1098, %v1099, %v1097
        %v1101 = vrsqrt.pop %v1037
        %v1102 = vmul.f32 %v1037, %v1101
        %vm1103 = vcmp.eq.f32.partialorder %v1037, inf
        %v1104 = vsel %vm1103, %v1037, %v1102
        %vm1105 = vcmp.eq.f32.partialorder %v1037, 0.0
        %v1106 = vand.u32 %v1037, 2147483648
        %v1107 = vsel %vm1105, %v1106, %v1104
        %v1108 = vrsqrt.pop %v1038
        %v1109 = vmul.f32 %v1038, %v1108
        %vm1110 = vcmp.eq.f32.partialorder %v1038, inf
        %v1111 = vsel %vm1110, %v1038, %v1109
        %vm1112 = vcmp.eq.f32.partialorder %v1038, 0.0
        %v1113 = vand.u32 %v1038, 2147483648
        %v1114 = vsel %vm1112, %v1113, %v1111
        %v1115 = vrsqrt.pop %v1039
        %v1116 = vmul.f32 %v1039, %v1115
        %vm1117 = vcmp.eq.f32.partialorder %v1039, inf
        %v1118 = vsel %vm1117, %v1039, %v1116
        %vm1119 = vcmp.eq.f32.partialorder %v1039, 0.0
        %v1120 = vand.u32 %v1039, 2147483648
        %v1121 = vsel %vm1119, %v1120, %v1118
        %v1122 = vrsqrt.pop %v1040
        %v1123 = vmul.f32 %v1040, %v1122
        %vm1124 = vcmp.eq.f32.partialorder %v1040, inf
        %v1125 = vsel %vm1124, %v1040, %v1123
        %vm1126 = vcmp.eq.f32.partialorder %v1040, 0.0
        %v1127 = vand.u32 %v1040, 2147483648
        %v1128 = vsel %vm1126, %v1127, %v1125
        %v1129 = vrsqrt.pop %v1041
        %v1130 = vmul.f32 %v1041, %v1129
        %vm1131 = vcmp.eq.f32.partialorder %v1041, inf
        %v1132 = vsel %vm1131, %v1041, %v1130
        %vm1133 = vcmp.eq.f32.partialorder %v1041, 0.0
        %v1134 = vand.u32 %v1041, 2147483648
        %v1135 = vsel %vm1133, %v1134, %v1132
        %v1136 = vrsqrt.pop %v1042
        %v1137 = vmul.f32 %v1042, %v1136
        %vm1138 = vcmp.eq.f32.partialorder %v1042, inf
        %v1139 = vsel %vm1138, %v1042, %v1137
        %vm1140 = vcmp.eq.f32.partialorder %v1042, 0.0
        %v1141 = vand.u32 %v1042, 2147483648
        %v1142 = vsel %vm1140, %v1141, %v1139
        %v1143 = vrsqrt.pop %v1043
        %v1144 = vmul.f32 %v1043, %v1143
        %vm1145 = vcmp.eq.f32.partialorder %v1043, inf
        %v1146 = vsel %vm1145, %v1043, %v1144
        %vm1147 = vcmp.eq.f32.partialorder %v1043, 0.0
        %v1148 = vand.u32 %v1043, 2147483648
        %v1149 = vsel %vm1147, %v1148, %v1146
        %v1150 = vrsqrt.pop %v1044
        %v1151 = vmul.f32 %v1044, %v1150
        %vm1152 = vcmp.eq.f32.partialorder %v1044, inf
        %v1153 = vsel %vm1152, %v1044, %v1151
        %vm1154 = vcmp.eq.f32.partialorder %v1044, 0.0
        %v1155 = vand.u32 %v1044, 2147483648
        %v1156 = vsel %vm1154, %v1155, %v1153
        %v1157 = vld [vmem:[%s594] sm:$0xff]
        %v1158 = vld [vmem:[%s594 + $0x8] sm:$0xff]
        %v1159 = vld [vmem:[%s594 + $0x10] sm:$0xff]
        %v1160 = vld [vmem:[%s594 + $0x18] sm:$0xff]
        %v1161 = vld [vmem:[%s594 + $0x20] sm:$0xff]
        %v1162 = vld [vmem:[%s594 + $0x28] sm:$0xff]
        %v1163 = vld [vmem:[%s594 + $0x30] sm:$0xff]
        %v1164 = vld [vmem:[%s594 + $0x38] sm:$0xff]
        %v1165 = vld [vmem:[%s594 + $0x40] sm:$0xff]
        %v1166 = vld [vmem:[%s594 + $0x48] sm:$0xff]
        %v1167 = vld [vmem:[%s594 + $0x50] sm:$0xff]
        %v1168 = vld [vmem:[%s594 + $0x58] sm:$0xff]
        %v1169 = vld [vmem:[%s594 + $0x60] sm:$0xff]
        %v1170 = vld [vmem:[%s594 + $0x68] sm:$0xff]
        %v1171 = vld [vmem:[%s594 + $0x70] sm:$0xff]
        %v1172 = vld [vmem:[%s594 + $0x78] sm:$0xff]
        %v1173 = vld [vmem:[%s611] sm:$0xff]
        %v1174 = vpack.c.bf16 %v1158, %v1157
        %v1175 = vpack.c.bf16 %v1160, %v1159
        %v1176 = vpack.c.bf16 %v1162, %v1161
        %v1177 = vpack.c.bf16 %v1164, %v1163
        %v1178 = vpack.c.bf16 %v1166, %v1165
        %v1179 = vpack.c.bf16 %v1168, %v1167
        %v1180 = vpack.c.bf16 %v1170, %v1169
        %v1181 = vpack.c.bf16 %v1172, %v1171
        %v1182 = vpack.c.bf16 %v1173, %v1173
        %v1184 = vshrl.u32 %v1174, 16
        %v1186 = vshll.u32 %v1174, 16
        %v1188 = vrot.slane %v1186, 1
        %v1189 = vor.u32 %v1184, %v1188
        %v1191 = vshll.u32 %v1175, 16
        %v1193 = vrot.slane %v1191, 1
        %v1194 = vsel %vm653, %v1189, %v1193
        %v1195 = vshrl.u32 %v1175, 16
        %v1197 = vor.u32 %v1195, %v1193
        %v1199 = vshll.u32 %v1176, 16
        %v1201 = vrot.slane %v1199, 1
        %v1202 = vsel %vm653, %v1197, %v1201
        %v1203 = vshrl.u32 %v1176, 16
        %v1205 = vor.u32 %v1203, %v1201
        %v1207 = vshll.u32 %v1177, 16
        %v1209 = vrot.slane %v1207, 1
        %v1210 = vsel %vm653, %v1205, %v1209
        %v1211 = vshrl.u32 %v1177, 16
        %v1213 = vor.u32 %v1211, %v1209
        %v1215 = vshll.u32 %v1178, 16
        %v1217 = vrot.slane %v1215, 1
        %v1218 = vsel %vm653, %v1213, %v1217
        %v1219 = vshrl.u32 %v1178, 16
        %v1221 = vor.u32 %v1219, %v1217
        %v1223 = vshll.u32 %v1179, 16
        %v1225 = vrot.slane %v1223, 1
        %v1226 = vsel %vm653, %v1221, %v1225
        %v1227 = vshrl.u32 %v1179, 16
        %v1229 = vor.u32 %v1227, %v1225
        %v1231 = vshll.u32 %v1180, 16
        %v1233 = vrot.slane %v1231, 1
        %v1234 = vsel %vm653, %v1229, %v1233
        %v1235 = vshrl.u32 %v1180, 16
        %v1237 = vor.u32 %v1235, %v1233
        %v1239 = vshll.u32 %v1181, 16
        %v1241 = vrot.slane %v1239, 1
        %v1242 = vsel %vm653, %v1237, %v1241
        %v1243 = vshrl.u32 %v1181, 16
        %v1245 = vor.u32 %v1243, %v1241
        %v1247 = vshll.u32 %v1182, 16
        %v1249 = vrot.slane %v1247, 1
        %v1250 = vsel %vm653, %v1245, %v1249
        %v1252 = vsel %vm734, %v1194, 0
        %v1255 = vsel %vm734, %v1202, 0
        %v1258 = vsel %vm734, %v1210, 0
        %v1261 = vsel %vm734, %v1218, 0
        %v1264 = vsel %vm734, %v1226, 0
        %v1267 = vsel %vm734, %v1234, 0
        %v1270 = vsel %vm734, %v1242, 0
        %v1273 = vsel %vm734, %v1250, 0
        %1275 = vmatprep.subr.bf16.mxu0 0
        %1276 = vmatpush1.bf16.msra.mxu0 0
        %1277 = vmatprep.subr.bf16.mxu0 0
        %1278 = vmatpush1.bf16.msra.mxu0 0
        %1279 = vmatprep.subr.bf16.mxu0 0
        %1280 = vmatpush1.bf16.msra.mxu0 0
        %1281 = vmatprep.subr.bf16.mxu0 0
        %1282 = vmatpush1.bf16.msra.mxu0 0
        %1283 = vmatprep.subr.bf16.mxu0 0
        %1284 = vmatpush1.bf16.msra.mxu0 0
        %1285 = vmatprep.subr.bf16.mxu0 0
        %1286 = vmatpush1.bf16.msra.mxu0 0
        %1287 = vmatprep.subr.bf16.mxu0 0
        %1288 = vmatpush1.bf16.msra.mxu0 %v731
        %1289 = vmatprep.subr.bf16.mxu0 0
        %1290 = vmatpush1.bf16.msra.mxu0 %v730
        %1291 = vmatprep.subr.bf16.mxu0 0
        %1292 = vmatpush2.bf16.msra.mxu0 0
        %1293 = vmatprep.subr.bf16.mxu0 0
        %1294 = vmatpush2.bf16.msra.mxu0 0
        %1295 = vmatprep.subr.bf16.mxu0 0
        %1296 = vmatpush2.bf16.msra.mxu0 0
        %1297 = vmatprep.subr.bf16.mxu0 0
        %1298 = vmatpush2.bf16.msra.mxu0 0
        %1299 = vmatprep.subr.bf16.mxu0 0
        %1300 = vmatpush2.bf16.msra.mxu0 0
        %1301 = vmatprep.subr.bf16.mxu0 0
        %1302 = vmatpush2.bf16.msra.mxu0 0
        %1303 = vmatprep.subr.bf16.mxu0 0
        %1304 = vmatpush2.bf16.msra.mxu0 0
        %1305 = vmatprep.subr.bf16.mxu0 0
        %1306 = vmatpush2.bf16.msra.mxu0 0
        %1307 = vmatprep.mubr.bf16.mxu0 0
        %1308 = vmatmul.mubr.bf16.gmra.mxu0 %v1252
        %v1309 = vpop.f32.mrf.mxu0
        %v1310 = vadd.f32 0.0, %v1309
        %v1311 = vpop.f32.mrf.mxu0
        %v1312 = vpop.f32.mrf.mxu0
        %v1313 = vadd.f32 0.0, %v1312
        %v1314 = vpop.f32.mrf.mxu0
        %1315 = vmatprep.mubr.bf16.mxu0 0
        %1316 = vmatmul.mubr.bf16.gmra.mxu0 %v1255
        %v1317 = vpop.f32.mrf.mxu0
        %v1318 = vadd.f32 0.0, %v1317
        %v1319 = vpop.f32.mrf.mxu0
        %v1320 = vpop.f32.mrf.mxu0
        %v1321 = vadd.f32 0.0, %v1320
        %v1322 = vpop.f32.mrf.mxu0
        %1323 = vmatprep.mubr.bf16.mxu0 0
        %1324 = vmatmul.mubr.bf16.gmra.mxu0 %v1258
        %v1325 = vpop.f32.mrf.mxu0
        %v1326 = vadd.f32 0.0, %v1325
        %v1327 = vpop.f32.mrf.mxu0
        %v1328 = vpop.f32.mrf.mxu0
        %v1329 = vadd.f32 0.0, %v1328
        %v1330 = vpop.f32.mrf.mxu0
        %1331 = vmatprep.mubr.bf16.mxu0 0
        %1332 = vmatmul.mubr.bf16.gmra.mxu0 %v1261
        %v1333 = vpop.f32.mrf.mxu0
        %v1334 = vadd.f32 0.0, %v1333
        %v1335 = vpop.f32.mrf.mxu0
        %v1336 = vpop.f32.mrf.mxu0
        %v1337 = vadd.f32 0.0, %v1336
        %v1338 = vpop.f32.mrf.mxu0
        %1339 = vmatprep.mubr.bf16.mxu0 0
        %1340 = vmatmul.mubr.bf16.gmra.mxu0 %v1264
        %v1341 = vpop.f32.mrf.mxu0
        %v1342 = vadd.f32 0.0, %v1341
        %v1343 = vpop.f32.mrf.mxu0
        %v1344 = vpop.f32.mrf.mxu0
        %v1345 = vadd.f32 0.0, %v1344
        %v1346 = vpop.f32.mrf.mxu0
        %1347 = vmatprep.mubr.bf16.mxu0 0
        %1348 = vmatmul.mubr.bf16.gmra.mxu0 %v1267
        %v1349 = vpop.f32.mrf.mxu0
        %v1350 = vadd.f32 0.0, %v1349
        %v1351 = vpop.f32.mrf.mxu0
        %v1352 = vpop.f32.mrf.mxu0
        %v1353 = vadd.f32 0.0, %v1352
        %v1354 = vpop.f32.mrf.mxu0
        %1355 = vmatprep.mubr.bf16.mxu0 0
        %1356 = vmatmul.mubr.bf16.gmra.mxu0 %v1270
        %v1357 = vpop.f32.mrf.mxu0
        %v1358 = vadd.f32 0.0, %v1357
        %v1359 = vpop.f32.mrf.mxu0
        %v1360 = vpop.f32.mrf.mxu0
        %v1361 = vadd.f32 0.0, %v1360
        %v1362 = vpop.f32.mrf.mxu0
        %1363 = vmatprep.mubr.bf16.mxu0 0
        %1364 = vmatmul.mubr.bf16.gmra.mxu0 %v1273
        %v1365 = vpop.f32.mrf.mxu0
        %v1366 = vadd.f32 0.0, %v1365
        %v1367 = vpop.f32.mrf.mxu0
        %v1368 = vpop.f32.mrf.mxu0
        %v1369 = vadd.f32 0.0, %v1368
        %v1370 = vpop.f32.mrf.mxu0
        %1371 = vdwg.mxu0
        %v1372 = vsel %vm734, %v1174, 0
        %v1374 = vsel %vm734, %v1175, 0
        %v1376 = vsel %vm734, %v1176, 0
        %v1378 = vsel %vm734, %v1177, 0
        %v1380 = vsel %vm734, %v1178, 0
        %v1382 = vsel %vm734, %v1179, 0
        %v1384 = vsel %vm734, %v1180, 0
        %v1386 = vsel %vm734, %v1181, 0
        %1388 = vmatprep.subr.bf16.mxu0 0
        %1389 = vmatpush1.bf16.msra.mxu0 0
        %1390 = vmatprep.subr.bf16.mxu0 0
        %1391 = vmatpush1.bf16.msra.mxu0 0
        %1392 = vmatprep.subr.bf16.mxu0 0
        %1393 = vmatpush1.bf16.msra.mxu0 0
        %1394 = vmatprep.subr.bf16.mxu0 0
        %1395 = vmatpush1.bf16.msra.mxu0 0
        %1396 = vmatprep.subr.bf16.mxu0 0
        %1397 = vmatpush1.bf16.msra.mxu0 0
        %1398 = vmatprep.subr.bf16.mxu0 0
        %1399 = vmatpush1.bf16.msra.mxu0 0
        %1400 = vmatprep.subr.bf16.mxu0 0
        %1401 = vmatpush1.bf16.msra.mxu0 %v865
        %1402 = vmatprep.subr.bf16.mxu0 0
        %1403 = vmatpush1.bf16.msra.mxu0 %v864
        %1404 = vmatprep.subr.bf16.mxu0 0
        %1405 = vmatpush2.bf16.msra.mxu0 0
        %1406 = vmatprep.subr.bf16.mxu0 0
        %1407 = vmatpush2.bf16.msra.mxu0 0
        %1408 = vmatprep.subr.bf16.mxu0 0
        %1409 = vmatpush2.bf16.msra.mxu0 0
        %1410 = vmatprep.subr.bf16.mxu0 0
        %1411 = vmatpush2.bf16.msra.mxu0 0
        %1412 = vmatprep.subr.bf16.mxu0 0
        %1413 = vmatpush2.bf16.msra.mxu0 0
        %1414 = vmatprep.subr.bf16.mxu0 0
        %1415 = vmatpush2.bf16.msra.mxu0 0
        %1416 = vmatprep.subr.bf16.mxu0 0
        %1417 = vmatpush2.bf16.msra.mxu0 0
        %1418 = vmatprep.subr.bf16.mxu0 0
        %1419 = vmatpush2.bf16.msra.mxu0 0
        %1420 = vmatprep.mubr.bf16.mxu0 0
        %1421 = vmatmul.mubr.bf16.gmra.mxu0 %v1372
        %v1422 = vpop.f32.mrf.mxu0
        %v1423 = vadd.f32 %v1310, %v1422
        %v1424 = vpop.f32.mrf.mxu0
        %v1425 = vpop.f32.mrf.mxu0
        %v1426 = vadd.f32 %v1313, %v1425
        %v1427 = vpop.f32.mrf.mxu0
        %1428 = vmatprep.mubr.bf16.mxu0 0
        %1429 = vmatmul.mubr.bf16.gmra.mxu0 %v1374
        %v1430 = vpop.f32.mrf.mxu0
        %v1431 = vadd.f32 %v1318, %v1430
        %v1432 = vpop.f32.mrf.mxu0
        %v1433 = vpop.f32.mrf.mxu0
        %v1434 = vadd.f32 %v1321, %v1433
        %v1435 = vpop.f32.mrf.mxu0
        %1436 = vmatprep.mubr.bf16.mxu0 0
        %1437 = vmatmul.mubr.bf16.gmra.mxu0 %v1376
        %v1438 = vpop.f32.mrf.mxu0
        %v1439 = vadd.f32 %v1326, %v1438
        %v1440 = vpop.f32.mrf.mxu0
        %v1441 = vpop.f32.mrf.mxu0
        %v1442 = vadd.f32 %v1329, %v1441
        %v1443 = vpop.f32.mrf.mxu0
        %1444 = vmatprep.mubr.bf16.mxu0 0
        %1445 = vmatmul.mubr.bf16.gmra.mxu0 %v1378
        %v1446 = vpop.f32.mrf.mxu0
        %v1447 = vadd.f32 %v1334, %v1446
        %v1448 = vpop.f32.mrf.mxu0
        %v1449 = vpop.f32.mrf.mxu0
        %v1450 = vadd.f32 %v1337, %v1449
        %v1451 = vpop.f32.mrf.mxu0
        %1452 = vmatprep.mubr.bf16.mxu0 0
        %1453 = vmatmul.mubr.bf16.gmra.mxu0 %v1380
        %v1454 = vpop.f32.mrf.mxu0
        %v1455 = vadd.f32 %v1342, %v1454
        %v1456 = vpop.f32.mrf.mxu0
        %v1457 = vpop.f32.mrf.mxu0
        %v1458 = vadd.f32 %v1345, %v1457
        %v1459 = vpop.f32.mrf.mxu0
        %1460 = vmatprep.mubr.bf16.mxu0 0
        %1461 = vmatmul.mubr.bf16.gmra.mxu0 %v1382
        %v1462 = vpop.f32.mrf.mxu0
        %v1463 = vadd.f32 %v1350, %v1462
        %v1464 = vpop.f32.mrf.mxu0
        %v1465 = vpop.f32.mrf.mxu0
        %v1466 = vadd.f32 %v1353, %v1465
        %v1467 = vpop.f32.mrf.mxu0
        %1468 = vmatprep.mubr.bf16.mxu0 0
        %1469 = vmatmul.mubr.bf16.gmra.mxu0 %v1384
        %v1470 = vpop.f32.mrf.mxu0
        %v1471 = vadd.f32 %v1358, %v1470
        %v1472 = vpop.f32.mrf.mxu0
        %v1473 = vpop.f32.mrf.mxu0
        %v1474 = vadd.f32 %v1361, %v1473
        %v1475 = vpop.f32.mrf.mxu0
        %1476 = vmatprep.mubr.bf16.mxu0 0
        %1477 = vmatmul.mubr.bf16.gmra.mxu0 %v1386
        %v1478 = vpop.f32.mrf.mxu0
        %v1479 = vadd.f32 %v1366, %v1478
        %v1480 = vpop.f32.mrf.mxu0
        %v1481 = vpop.f32.mrf.mxu0
        %v1482 = vadd.f32 %v1369, %v1481
        %v1483 = vpop.f32.mrf.mxu0
        %1484 = vdwg.mxu0
        %v1485 = vmul.f32 %v1423, %v1423
        %v1486 = vmul.f32 %v1426, %v1426
        %v1487 = vmul.f32 %v1431, %v1431
        %v1488 = vmul.f32 %v1434, %v1434
        %v1489 = vmul.f32 %v1439, %v1439
        %v1490 = vmul.f32 %v1442, %v1442
        %v1491 = vmul.f32 %v1447, %v1447
        %v1492 = vmul.f32 %v1450, %v1450
        %v1493 = vmul.f32 %v1455, %v1455
        %v1494 = vmul.f32 %v1458, %v1458
        %v1495 = vmul.f32 %v1463, %v1463
        %v1496 = vmul.f32 %v1466, %v1466
        %v1497 = vmul.f32 %v1471, %v1471
        %v1498 = vmul.f32 %v1474, %v1474
        %v1499 = vmul.f32 %v1479, %v1479
        %v1500 = vmul.f32 %v1482, %v1482
        %1501 = vrot.lane.b32.xlu0 %v1485, 64
        %v1502 = vpop.permute.xlu0 %1501
        %1503 = vrot.lane.b32.xlu0 %v1486, 64
        %v1504 = vpop.permute.xlu0 %1503
        %1505 = vrot.lane.b32.xlu0 %v1487, 64
        %v1506 = vpop.permute.xlu0 %1505
        %1507 = vrot.lane.b32.xlu0 %v1488, 64
        %v1508 = vpop.permute.xlu0 %1507
        %1509 = vrot.lane.b32.xlu0 %v1489, 64
        %v1510 = vpop.permute.xlu0 %1509
        %1511 = vrot.lane.b32.xlu0 %v1490, 64
        %v1512 = vpop.permute.xlu0 %1511
        %1513 = vrot.lane.b32.xlu0 %v1491, 64
        %v1514 = vpop.permute.xlu0 %1513
        %1515 = vrot.lane.b32.xlu0 %v1492, 64
        %v1516 = vpop.permute.xlu0 %1515
        %1517 = vrot.lane.b32.xlu0 %v1493, 64
        %v1518 = vpop.permute.xlu0 %1517
        %1519 = vrot.lane.b32.xlu0 %v1494, 64
        %v1520 = vpop.permute.xlu0 %1519
        %1521 = vrot.lane.b32.xlu0 %v1495, 64
        %v1522 = vpop.permute.xlu0 %1521
        %1523 = vrot.lane.b32.xlu0 %v1496, 64
        %v1524 = vpop.permute.xlu0 %1523
        %1525 = vrot.lane.b32.xlu0 %v1497, 64
        %v1526 = vpop.permute.xlu0 %1525
        %1527 = vrot.lane.b32.xlu0 %v1498, 64
        %v1528 = vpop.permute.xlu0 %1527
        %1529 = vrot.lane.b32.xlu0 %v1499, 64
        %v1530 = vpop.permute.xlu0 %1529
        %1531 = vrot.lane.b32.xlu0 %v1500, 64
        %v1532 = vpop.permute.xlu0 %1531
        %v1533 = vadd.f32 %v1485, %v1502
        %v1534 = vadd.f32 %v1486, %v1504
        %v1535 = vadd.f32 %v1487, %v1506
        %v1536 = vadd.f32 %v1488, %v1508
        %v1537 = vadd.f32 %v1489, %v1510
        %v1538 = vadd.f32 %v1490, %v1512
        %v1539 = vadd.f32 %v1491, %v1514
        %v1540 = vadd.f32 %v1492, %v1516
        %v1541 = vadd.f32 %v1493, %v1518
        %v1542 = vadd.f32 %v1494, %v1520
        %v1543 = vadd.f32 %v1495, %v1522
        %v1544 = vadd.f32 %v1496, %v1524
        %v1545 = vadd.f32 %v1497, %v1526
        %v1546 = vadd.f32 %v1498, %v1528
        %v1547 = vadd.f32 %v1499, %v1530
        %v1548 = vadd.f32 %v1500, %v1532
        %v1549 = vrsqrt.pop %v1533
        %v1550 = vmul.f32 %v1533, %v1549
        %vm1551 = vcmp.eq.f32.partialorder %v1533, inf
        %v1552 = vsel %vm1551, %v1533, %v1550
        %vm1553 = vcmp.eq.f32.partialorder %v1533, 0.0
        %v1554 = vand.u32 %v1533, 2147483648
        %v1555 = vsel %vm1553, %v1554, %v1552
        %v1556 = vrsqrt.pop %v1534
        %v1557 = vmul.f32 %v1534, %v1556
        %vm1558 = vcmp.eq.f32.partialorder %v1534, inf
        %v1559 = vsel %vm1558, %v1534, %v1557
        %vm1560 = vcmp.eq.f32.partialorder %v1534, 0.0
        %v1561 = vand.u32 %v1534, 2147483648
        %v1562 = vsel %vm1560, %v1561, %v1559
        %v1563 = vrsqrt.pop %v1535
        %v1564 = vmul.f32 %v1535, %v1563
        %vm1565 = vcmp.eq.f32.partialorder %v1535, inf
        %v1566 = vsel %vm1565, %v1535, %v1564
        %vm1567 = vcmp.eq.f32.partialorder %v1535, 0.0
        %v1568 = vand.u32 %v1535, 2147483648
        %v1569 = vsel %vm1567, %v1568, %v1566
        %v1570 = vrsqrt.pop %v1536
        %v1571 = vmul.f32 %v1536, %v1570
        %vm1572 = vcmp.eq.f32.partialorder %v1536, inf
        %v1573 = vsel %vm1572, %v1536, %v1571
        %vm1574 = vcmp.eq.f32.partialorder %v1536, 0.0
        %v1575 = vand.u32 %v1536, 2147483648
        %v1576 = vsel %vm1574, %v1575, %v1573
        %v1577 = vrsqrt.pop %v1537
        %v1578 = vmul.f32 %v1537, %v1577
        %vm1579 = vcmp.eq.f32.partialorder %v1537, inf
        %v1580 = vsel %vm1579, %v1537, %v1578
        %vm1581 = vcmp.eq.f32.partialorder %v1537, 0.0
        %v1582 = vand.u32 %v1537, 2147483648
        %v1583 = vsel %vm1581, %v1582, %v1580
        %v1584 = vrsqrt.pop %v1538
        %v1585 = vmul.f32 %v1538, %v1584
        %vm1586 = vcmp.eq.f32.partialorder %v1538, inf
        %v1587 = vsel %vm1586, %v1538, %v1585
        %vm1588 = vcmp.eq.f32.partialorder %v1538, 0.0
        %v1589 = vand.u32 %v1538, 2147483648
        %v1590 = vsel %vm1588, %v1589, %v1587
        %v1591 = vrsqrt.pop %v1539
        %v1592 = vmul.f32 %v1539, %v1591
        %vm1593 = vcmp.eq.f32.partialorder %v1539, inf
        %v1594 = vsel %vm1593, %v1539, %v1592
        %vm1595 = vcmp.eq.f32.partialorder %v1539, 0.0
        %v1596 = vand.u32 %v1539, 2147483648
        %v1597 = vsel %vm1595, %v1596, %v1594
        %v1598 = vrsqrt.pop %v1540
        %v1599 = vmul.f32 %v1540, %v1598
        %vm1600 = vcmp.eq.f32.partialorder %v1540, inf
        %v1601 = vsel %vm1600, %v1540, %v1599
        %vm1602 = vcmp.eq.f32.partialorder %v1540, 0.0
        %v1603 = vand.u32 %v1540, 2147483648
        %v1604 = vsel %vm1602, %v1603, %v1601
        %v1605 = vrsqrt.pop %v1541
        %v1606 = vmul.f32 %v1541, %v1605
        %vm1607 = vcmp.eq.f32.partialorder %v1541, inf
        %v1608 = vsel %vm1607, %v1541, %v1606
        %vm1609 = vcmp.eq.f32.partialorder %v1541, 0.0
        %v1610 = vand.u32 %v1541, 2147483648
        %v1611 = vsel %vm1609, %v1610, %v1608
        %v1612 = vrsqrt.pop %v1542
        %v1613 = vmul.f32 %v1542, %v1612
        %vm1614 = vcmp.eq.f32.partialorder %v1542, inf
        %v1615 = vsel %vm1614, %v1542, %v1613
        %vm1616 = vcmp.eq.f32.partialorder %v1542, 0.0
        %v1617 = vand.u32 %v1542, 2147483648
        %v1618 = vsel %vm1616, %v1617, %v1615
        %v1619 = vrsqrt.pop %v1543
        %v1620 = vmul.f32 %v1543, %v1619
        %vm1621 = vcmp.eq.f32.partialorder %v1543, inf
        %v1622 = vsel %vm1621, %v1543, %v1620
        %vm1623 = vcmp.eq.f32.partialorder %v1543, 0.0
        %v1624 = vand.u32 %v1543, 2147483648
        %v1625 = vsel %vm1623, %v1624, %v1622
        %v1626 = vrsqrt.pop %v1544
        %v1627 = vmul.f32 %v1544, %v1626
        %vm1628 = vcmp.eq.f32.partialorder %v1544, inf
        %v1629 = vsel %vm1628, %v1544, %v1627
        %vm1630 = vcmp.eq.f32.partialorder %v1544, 0.0
        %v1631 = vand.u32 %v1544, 2147483648
        %v1632 = vsel %vm1630, %v1631, %v1629
        %v1633 = vrsqrt.pop %v1545
        %v1634 = vmul.f32 %v1545, %v1633
        %vm1635 = vcmp.eq.f32.partialorder %v1545, inf
        %v1636 = vsel %vm1635, %v1545, %v1634
        %vm1637 = vcmp.eq.f32.partialorder %v1545, 0.0
        %v1638 = vand.u32 %v1545, 2147483648
        %v1639 = vsel %vm1637, %v1638, %v1636
        %v1640 = vrsqrt.pop %v1546
        %v1641 = vmul.f32 %v1546, %v1640
        %vm1642 = vcmp.eq.f32.partialorder %v1546, inf
        %v1643 = vsel %vm1642, %v1546, %v1641
        %vm1644 = vcmp.eq.f32.partialorder %v1546, 0.0
        %v1645 = vand.u32 %v1546, 2147483648
        %v1646 = vsel %vm1644, %v1645, %v1643
        %v1647 = vrsqrt.pop %v1547
        %v1648 = vmul.f32 %v1547, %v1647
        %vm1649 = vcmp.eq.f32.partialorder %v1547, inf
        %v1650 = vsel %vm1649, %v1547, %v1648
        %vm1651 = vcmp.eq.f32.partialorder %v1547, 0.0
        %v1652 = vand.u32 %v1547, 2147483648
        %v1653 = vsel %vm1651, %v1652, %v1650
        %v1654 = vrsqrt.pop %v1548
        %v1655 = vmul.f32 %v1548, %v1654
        %vm1656 = vcmp.eq.f32.partialorder %v1548, inf
        %v1657 = vsel %vm1656, %v1548, %v1655
        %vm1658 = vcmp.eq.f32.partialorder %v1548, 0.0
        %v1659 = vand.u32 %v1548, 2147483648
        %v1660 = vsel %vm1658, %v1659, %v1657
        %v1661 = vadd.f32 %v1051, %v1555
        %v1662 = vadd.f32 %v1058, %v1562
        %v1663 = vadd.f32 %v1065, %v1569
        %v1664 = vadd.f32 %v1072, %v1576
        %v1665 = vadd.f32 %v1079, %v1583
        %v1666 = vadd.f32 %v1086, %v1590
        %v1667 = vadd.f32 %v1093, %v1597
        %v1668 = vadd.f32 %v1100, %v1604
        %v1669 = vadd.f32 %v1107, %v1611
        %v1670 = vadd.f32 %v1114, %v1618
        %v1671 = vadd.f32 %v1121, %v1625
        %v1672 = vadd.f32 %v1128, %v1632
        %v1673 = vadd.f32 %v1135, %v1639
        %v1674 = vadd.f32 %v1142, %v1646
        %v1675 = vadd.f32 %v1149, %v1653
        %v1676 = vadd.f32 %v1156, %v1660
        %v1677 = vadd.f32 %v1661, 1e-08
        %v1678 = vadd.f32 %v1662, 1e-08
        %v1679 = vadd.f32 %v1663, 1e-08
        %v1680 = vadd.f32 %v1664, 1e-08
        %v1681 = vadd.f32 %v1665, 1e-08
        %v1682 = vadd.f32 %v1666, 1e-08
        %v1683 = vadd.f32 %v1667, 1e-08
        %v1684 = vadd.f32 %v1668, 1e-08
        %v1685 = vadd.f32 %v1669, 1e-08
        %v1686 = vadd.f32 %v1670, 1e-08
        %v1687 = vadd.f32 %v1671, 1e-08
        %v1688 = vadd.f32 %v1672, 1e-08
        %v1689 = vadd.f32 %v1673, 1e-08
        %v1690 = vadd.f32 %v1674, 1e-08
        %v1691 = vadd.f32 %v1675, 1e-08
        %v1692 = vadd.f32 %v1676, 1e-08
        %v1693 = vrcp.pop %v1677
        %v1694 = vmul.f32 %v1051, %v1693
        %v1695 = vrcp.pop %v1678
        %v1696 = vmul.f32 %v1058, %v1695
        %v1697 = vrcp.pop %v1679
        %v1698 = vmul.f32 %v1065, %v1697
        %v1699 = vrcp.pop %v1680
        %v1700 = vmul.f32 %v1072, %v1699
        %v1701 = vrcp.pop %v1681
        %v1702 = vmul.f32 %v1079, %v1701
        %v1703 = vrcp.pop %v1682
        %v1704 = vmul.f32 %v1086, %v1703
        %v1705 = vrcp.pop %v1683
        %v1706 = vmul.f32 %v1093, %v1705
        %v1707 = vrcp.pop %v1684
        %v1708 = vmul.f32 %v1100, %v1707
        %v1709 = vrcp.pop %v1685
        %v1710 = vmul.f32 %v1107, %v1709
        %v1711 = vrcp.pop %v1686
        %v1712 = vmul.f32 %v1114, %v1711
        %v1713 = vrcp.pop %v1687
        %v1714 = vmul.f32 %v1121, %v1713
        %v1715 = vrcp.pop %v1688
        %v1716 = vmul.f32 %v1128, %v1715
        %v1717 = vrcp.pop %v1689
        %v1718 = vmul.f32 %v1135, %v1717
        %v1719 = vrcp.pop %v1690
        %v1720 = vmul.f32 %v1142, %v1719
        %v1721 = vrcp.pop %v1691
        %v1722 = vmul.f32 %v1149, %v1721
        %v1723 = vrcp.pop %v1692
        %v1724 = vmul.f32 %v1156, %v1723
        %v1725 = vld [vmem:[%s526] sm:$0xff]
        %v1726 = vld [vmem:[%s526 + $0x8] sm:$0xff]
        %v1727 = vld [vmem:[%s526 + $0x10] sm:$0xff]
        %v1728 = vld [vmem:[%s526 + $0x18] sm:$0xff]
        %v1729 = vld [vmem:[%s526 + $0x20] sm:$0xff]
        %v1730 = vld [vmem:[%s526 + $0x28] sm:$0xff]
        %v1731 = vld [vmem:[%s526 + $0x30] sm:$0xff]
        %v1732 = vld [vmem:[%s526 + $0x38] sm:$0xff]
        %v1733 = vld [vmem:[%s526 + $0x40] sm:$0xff]
        %v1734 = vld [vmem:[%s526 + $0x48] sm:$0xff]
        %v1735 = vld [vmem:[%s526 + $0x50] sm:$0xff]
        %v1736 = vld [vmem:[%s526 + $0x58] sm:$0xff]
        %v1737 = vld [vmem:[%s526 + $0x60] sm:$0xff]
        %v1738 = vld [vmem:[%s526 + $0x68] sm:$0xff]
        %v1739 = vld [vmem:[%s526 + $0x70] sm:$0xff]
        %v1740 = vld [vmem:[%s526 + $0x78] sm:$0xff]
        %v1741 = vld [vmem:[%s543] sm:$0xff]
        %v1742 = vpack.c.bf16 %v1726, %v1725
        %v1743 = vpack.c.bf16 %v1728, %v1727
        %v1744 = vpack.c.bf16 %v1730, %v1729
        %v1745 = vpack.c.bf16 %v1732, %v1731
        %v1746 = vpack.c.bf16 %v1734, %v1733
        %v1747 = vpack.c.bf16 %v1736, %v1735
        %v1748 = vpack.c.bf16 %v1738, %v1737
        %v1749 = vpack.c.bf16 %v1740, %v1739
        %v1750 = vpack.c.bf16 %v1741, %v1741
        %v1752 = vshrl.u32 %v1742, 16
        %v1754 = vshll.u32 %v1742, 16
        %v1756 = vrot.slane %v1754, 1
        %v1757 = vor.u32 %v1752, %v1756
        %v1759 = vshll.u32 %v1743, 16
        %v1761 = vrot.slane %v1759, 1
        %v1762 = vsel %vm653, %v1757, %v1761
        %v1763 = vshrl.u32 %v1743, 16
        %v1765 = vor.u32 %v1763, %v1761
        %v1767 = vshll.u32 %v1744, 16
        %v1769 = vrot.slane %v1767, 1
        %v1770 = vsel %vm653, %v1765, %v1769
        %v1771 = vshrl.u32 %v1744, 16
        %v1773 = vor.u32 %v1771, %v1769
        %v1775 = vshll.u32 %v1745, 16
        %v1777 = vrot.slane %v1775, 1
        %v1778 = vsel %vm653, %v1773, %v1777
        %v1779 = vshrl.u32 %v1745, 16
        %v1781 = vor.u32 %v1779, %v1777
        %v1783 = vshll.u32 %v1746, 16
        %v1785 = vrot.slane %v1783, 1
        %v1786 = vsel %vm653, %v1781, %v1785
        %v1787 = vshrl.u32 %v1746, 16
        %v1789 = vor.u32 %v1787, %v1785
        %v1791 = vshll.u32 %v1747, 16
        %v1793 = vrot.slane %v1791, 1
        %v1794 = vsel %vm653, %v1789, %v1793
        %v1795 = vshrl.u32 %v1747, 16
        %v1797 = vor.u32 %v1795, %v1793
        %v1799 = vshll.u32 %v1748, 16
        %v1801 = vrot.slane %v1799, 1
        %v1802 = vsel %vm653, %v1797, %v1801
        %v1803 = vshrl.u32 %v1748, 16
        %v1805 = vor.u32 %v1803, %v1801
        %v1807 = vshll.u32 %v1749, 16
        %v1809 = vrot.slane %v1807, 1
        %v1810 = vsel %vm653, %v1805, %v1809
        %v1811 = vshrl.u32 %v1749, 16
        %v1813 = vor.u32 %v1811, %v1809
        %v1815 = vshll.u32 %v1750, 16
        %v1817 = vrot.slane %v1815, 1
        %v1818 = vsel %vm653, %v1813, %v1817
        %v1820 = vsel %vm734, %v1762, 0
        %v1823 = vsel %vm734, %v1770, 0
        %v1826 = vsel %vm734, %v1778, 0
        %v1829 = vsel %vm734, %v1786, 0
        %v1832 = vsel %vm734, %v1794, 0
        %v1835 = vsel %vm734, %v1802, 0
        %v1838 = vsel %vm734, %v1810, 0
        %v1841 = vsel %vm734, %v1818, 0
        %1843 = vmatprep.subr.bf16.mxu0 0
        %1844 = vmatpush1.bf16.msra.mxu0 0
        %1845 = vmatprep.subr.bf16.mxu0 0
        %1846 = vmatpush1.bf16.msra.mxu0 0
        %1847 = vmatprep.subr.bf16.mxu0 0
        %1848 = vmatpush1.bf16.msra.mxu0 0
        %1849 = vmatprep.subr.bf16.mxu0 0
        %1850 = vmatpush1.bf16.msra.mxu0 0
        %1851 = vmatprep.subr.bf16.mxu0 0
        %1852 = vmatpush1.bf16.msra.mxu0 0
        %1853 = vmatprep.subr.bf16.mxu0 0
        %1854 = vmatpush1.bf16.msra.mxu0 0
        %1855 = vmatprep.subr.bf16.mxu0 0
        %1856 = vmatpush1.bf16.msra.mxu0 %v731
        %1857 = vmatprep.subr.bf16.mxu0 0
        %1858 = vmatpush1.bf16.msra.mxu0 %v730
        %1859 = vmatprep.subr.bf16.mxu0 0
        %1860 = vmatpush2.bf16.msra.mxu0 0
        %1861 = vmatprep.subr.bf16.mxu0 0
        %1862 = vmatpush2.bf16.msra.mxu0 0
        %1863 = vmatprep.subr.bf16.mxu0 0
        %1864 = vmatpush2.bf16.msra.mxu0 0
        %1865 = vmatprep.subr.bf16.mxu0 0
        %1866 = vmatpush2.bf16.msra.mxu0 0
        %1867 = vmatprep.subr.bf16.mxu0 0
        %1868 = vmatpush2.bf16.msra.mxu0 0
        %1869 = vmatprep.subr.bf16.mxu0 0
        %1870 = vmatpush2.bf16.msra.mxu0 0
        %1871 = vmatprep.subr.bf16.mxu0 0
        %1872 = vmatpush2.bf16.msra.mxu0 0
        %1873 = vmatprep.subr.bf16.mxu0 0
        %1874 = vmatpush2.bf16.msra.mxu0 0
        %1875 = vmatprep.mubr.bf16.mxu0 0
        %1876 = vmatmul.mubr.bf16.gmra.mxu0 %v1820
        %v1877 = vpop.f32.mrf.mxu0
        %v1878 = vadd.f32 0.0, %v1877
        %v1879 = vpop.f32.mrf.mxu0
        %v1880 = vpop.f32.mrf.mxu0
        %v1881 = vadd.f32 0.0, %v1880
        %v1882 = vpop.f32.mrf.mxu0
        %1883 = vmatprep.mubr.bf16.mxu0 0
        %1884 = vmatmul.mubr.bf16.gmra.mxu0 %v1823
        %v1885 = vpop.f32.mrf.mxu0
        %v1886 = vadd.f32 0.0, %v1885
        %v1887 = vpop.f32.mrf.mxu0
        %v1888 = vpop.f32.mrf.mxu0
        %v1889 = vadd.f32 0.0, %v1888
        %v1890 = vpop.f32.mrf.mxu0
        %1891 = vmatprep.mubr.bf16.mxu0 0
        %1892 = vmatmul.mubr.bf16.gmra.mxu0 %v1826
        %v1893 = vpop.f32.mrf.mxu0
        %v1894 = vadd.f32 0.0, %v1893
        %v1895 = vpop.f32.mrf.mxu0
        %v1896 = vpop.f32.mrf.mxu0
        %v1897 = vadd.f32 0.0, %v1896
        %v1898 = vpop.f32.mrf.mxu0
        %1899 = vmatprep.mubr.bf16.mxu0 0
        %1900 = vmatmul.mubr.bf16.gmra.mxu0 %v1829
        %v1901 = vpop.f32.mrf.mxu0
        %v1902 = vadd.f32 0.0, %v1901
        %v1903 = vpop.f32.mrf.mxu0
        %v1904 = vpop.f32.mrf.mxu0
        %v1905 = vadd.f32 0.0, %v1904
        %v1906 = vpop.f32.mrf.mxu0
        %1907 = vmatprep.mubr.bf16.mxu0 0
        %1908 = vmatmul.mubr.bf16.gmra.mxu0 %v1832
        %v1909 = vpop.f32.mrf.mxu0
        %v1910 = vadd.f32 0.0, %v1909
        %v1911 = vpop.f32.mrf.mxu0
        %v1912 = vpop.f32.mrf.mxu0
        %v1913 = vadd.f32 0.0, %v1912
        %v1914 = vpop.f32.mrf.mxu0
        %1915 = vmatprep.mubr.bf16.mxu0 0
        %1916 = vmatmul.mubr.bf16.gmra.mxu0 %v1835
        %v1917 = vpop.f32.mrf.mxu0
        %v1918 = vadd.f32 0.0, %v1917
        %v1919 = vpop.f32.mrf.mxu0
        %v1920 = vpop.f32.mrf.mxu0
        %v1921 = vadd.f32 0.0, %v1920
        %v1922 = vpop.f32.mrf.mxu0
        %1923 = vmatprep.mubr.bf16.mxu0 0
        %1924 = vmatmul.mubr.bf16.gmra.mxu0 %v1838
        %v1925 = vpop.f32.mrf.mxu0
        %v1926 = vadd.f32 0.0, %v1925
        %v1927 = vpop.f32.mrf.mxu0
        %v1928 = vpop.f32.mrf.mxu0
        %v1929 = vadd.f32 0.0, %v1928
        %v1930 = vpop.f32.mrf.mxu0
        %1931 = vmatprep.mubr.bf16.mxu0 0
        %1932 = vmatmul.mubr.bf16.gmra.mxu0 %v1841
        %v1933 = vpop.f32.mrf.mxu0
        %v1934 = vadd.f32 0.0, %v1933
        %v1935 = vpop.f32.mrf.mxu0
        %v1936 = vpop.f32.mrf.mxu0
        %v1937 = vadd.f32 0.0, %v1936
        %v1938 = vpop.f32.mrf.mxu0
        %1939 = vdwg.mxu0
        %v1940 = vsel %vm734, %v1742, 0
        %v1942 = vsel %vm734, %v1743, 0
        %v1944 = vsel %vm734, %v1744, 0
        %v1946 = vsel %vm734, %v1745, 0
        %v1948 = vsel %vm734, %v1746, 0
        %v1950 = vsel %vm734, %v1747, 0
        %v1952 = vsel %vm734, %v1748, 0
        %v1954 = vsel %vm734, %v1749, 0
        %1956 = vmatprep.subr.bf16.mxu0 0
        %1957 = vmatpush1.bf16.msra.mxu0 0
        %1958 = vmatprep.subr.bf16.mxu0 0
        %1959 = vmatpush1.bf16.msra.mxu0 0
        %1960 = vmatprep.subr.bf16.mxu0 0
        %1961 = vmatpush1.bf16.msra.mxu0 0
        %1962 = vmatprep.subr.bf16.mxu0 0
        %1963 = vmatpush1.bf16.msra.mxu0 0
        %1964 = vmatprep.subr.bf16.mxu0 0
        %1965 = vmatpush1.bf16.msra.mxu0 0
        %1966 = vmatprep.subr.bf16.mxu0 0
        %1967 = vmatpush1.bf16.msra.mxu0 0
        %1968 = vmatprep.subr.bf16.mxu0 0
        %1969 = vmatpush1.bf16.msra.mxu0 %v865
        %1970 = vmatprep.subr.bf16.mxu0 0
        %1971 = vmatpush1.bf16.msra.mxu0 %v864
        %1972 = vmatprep.subr.bf16.mxu0 0
        %1973 = vmatpush2.bf16.msra.mxu0 0
        %1974 = vmatprep.subr.bf16.mxu0 0
        %1975 = vmatpush2.bf16.msra.mxu0 0
        %1976 = vmatprep.subr.bf16.mxu0 0
        %1977 = vmatpush2.bf16.msra.mxu0 0
        %1978 = vmatprep.subr.bf16.mxu0 0
        %1979 = vmatpush2.bf16.msra.mxu0 0
        %1980 = vmatprep.subr.bf16.mxu0 0
        %1981 = vmatpush2.bf16.msra.mxu0 0
        %1982 = vmatprep.subr.bf16.mxu0 0
        %1983 = vmatpush2.bf16.msra.mxu0 0
        %1984 = vmatprep.subr.bf16.mxu0 0
        %1985 = vmatpush2.bf16.msra.mxu0 0
        %1986 = vmatprep.subr.bf16.mxu0 0
        %1987 = vmatpush2.bf16.msra.mxu0 0
        %1988 = vmatprep.mubr.bf16.mxu0 0
        %1989 = vmatmul.mubr.bf16.gmra.mxu0 %v1940
        %v1990 = vpop.f32.mrf.mxu0
        %v1991 = vadd.f32 %v1878, %v1990
        %v1992 = vpop.f32.mrf.mxu0
        %v1993 = vpop.f32.mrf.mxu0
        %v1994 = vadd.f32 %v1881, %v1993
        %v1995 = vpop.f32.mrf.mxu0
        %1996 = vmatprep.mubr.bf16.mxu0 0
        %1997 = vmatmul.mubr.bf16.gmra.mxu0 %v1942
        %v1998 = vpop.f32.mrf.mxu0
        %v1999 = vadd.f32 %v1886, %v1998
        %v2000 = vpop.f32.mrf.mxu0
        %v2001 = vpop.f32.mrf.mxu0
        %v2002 = vadd.f32 %v1889, %v2001
        %v2003 = vpop.f32.mrf.mxu0
        %2004 = vmatprep.mubr.bf16.mxu0 0
        %2005 = vmatmul.mubr.bf16.gmra.mxu0 %v1944
        %v2006 = vpop.f32.mrf.mxu0
        %v2007 = vadd.f32 %v1894, %v2006
        %v2008 = vpop.f32.mrf.mxu0
        %v2009 = vpop.f32.mrf.mxu0
        %v2010 = vadd.f32 %v1897, %v2009
        %v2011 = vpop.f32.mrf.mxu0
        %2012 = vmatprep.mubr.bf16.mxu0 0
        %2013 = vmatmul.mubr.bf16.gmra.mxu0 %v1946
        %v2014 = vpop.f32.mrf.mxu0
        %v2015 = vadd.f32 %v1902, %v2014
        %v2016 = vpop.f32.mrf.mxu0
        %v2017 = vpop.f32.mrf.mxu0
        %v2018 = vadd.f32 %v1905, %v2017
        %v2019 = vpop.f32.mrf.mxu0
        %2020 = vmatprep.mubr.bf16.mxu0 0
        %2021 = vmatmul.mubr.bf16.gmra.mxu0 %v1948
        %v2022 = vpop.f32.mrf.mxu0
        %v2023 = vadd.f32 %v1910, %v2022
        %v2024 = vpop.f32.mrf.mxu0
        %v2025 = vpop.f32.mrf.mxu0
        %v2026 = vadd.f32 %v1913, %v2025
        %v2027 = vpop.f32.mrf.mxu0
        %2028 = vmatprep.mubr.bf16.mxu0 0
        %2029 = vmatmul.mubr.bf16.gmra.mxu0 %v1950
        %v2030 = vpop.f32.mrf.mxu0
        %v2031 = vadd.f32 %v1918, %v2030
        %v2032 = vpop.f32.mrf.mxu0
        %v2033 = vpop.f32.mrf.mxu0
        %v2034 = vadd.f32 %v1921, %v2033
        %v2035 = vpop.f32.mrf.mxu0
        %2036 = vmatprep.mubr.bf16.mxu0 0
        %2037 = vmatmul.mubr.bf16.gmra.mxu0 %v1952
        %v2038 = vpop.f32.mrf.mxu0
        %v2039 = vadd.f32 %v1926, %v2038
        %v2040 = vpop.f32.mrf.mxu0
        %v2041 = vpop.f32.mrf.mxu0
        %v2042 = vadd.f32 %v1929, %v2041
        %v2043 = vpop.f32.mrf.mxu0
        %2044 = vmatprep.mubr.bf16.mxu0 0
        %2045 = vmatmul.mubr.bf16.gmra.mxu0 %v1954
        %v2046 = vpop.f32.mrf.mxu0
        %v2047 = vadd.f32 %v1934, %v2046
        %v2048 = vpop.f32.mrf.mxu0
        %v2049 = vpop.f32.mrf.mxu0
        %v2050 = vadd.f32 %v1937, %v2049
        %v2051 = vpop.f32.mrf.mxu0
        %2052 = vdwg.mxu0
        %v2053 = vmul.f32 %v1991, %v1991
        %v2054 = vmul.f32 %v1994, %v1994
        %v2055 = vmul.f32 %v1999, %v1999
        %v2056 = vmul.f32 %v2002, %v2002
        %v2057 = vmul.f32 %v2007, %v2007
        %v2058 = vmul.f32 %v2010, %v2010
        %v2059 = vmul.f32 %v2015, %v2015
        %v2060 = vmul.f32 %v2018, %v2018
        %v2061 = vmul.f32 %v2023, %v2023
        %v2062 = vmul.f32 %v2026, %v2026
        %v2063 = vmul.f32 %v2031, %v2031
        %v2064 = vmul.f32 %v2034, %v2034
        %v2065 = vmul.f32 %v2039, %v2039
        %v2066 = vmul.f32 %v2042, %v2042
        %v2067 = vmul.f32 %v2047, %v2047
        %v2068 = vmul.f32 %v2050, %v2050
        %2069 = vrot.lane.b32.xlu0 %v2053, 64
        %v2070 = vpop.permute.xlu0 %2069
        %2071 = vrot.lane.b32.xlu0 %v2054, 64
        %v2072 = vpop.permute.xlu0 %2071
        %2073 = vrot.lane.b32.xlu0 %v2055, 64
        %v2074 = vpop.permute.xlu0 %2073
        %2075 = vrot.lane.b32.xlu0 %v2056, 64
        %v2076 = vpop.permute.xlu0 %2075
        %2077 = vrot.lane.b32.xlu0 %v2057, 64
        %v2078 = vpop.permute.xlu0 %2077
        %2079 = vrot.lane.b32.xlu0 %v2058, 64
        %v2080 = vpop.permute.xlu0 %2079
        %2081 = vrot.lane.b32.xlu0 %v2059, 64
        %v2082 = vpop.permute.xlu0 %2081
        %2083 = vrot.lane.b32.xlu0 %v2060, 64
        %v2084 = vpop.permute.xlu0 %2083
        %2085 = vrot.lane.b32.xlu0 %v2061, 64
        %v2086 = vpop.permute.xlu0 %2085
        %2087 = vrot.lane.b32.xlu0 %v2062, 64
        %v2088 = vpop.permute.xlu0 %2087
        %2089 = vrot.lane.b32.xlu0 %v2063, 64
        %v2090 = vpop.permute.xlu0 %2089
        %2091 = vrot.lane.b32.xlu0 %v2064, 64
        %v2092 = vpop.permute.xlu0 %2091
        %2093 = vrot.lane.b32.xlu0 %v2065, 64
        %v2094 = vpop.permute.xlu0 %2093
        %2095 = vrot.lane.b32.xlu0 %v2066, 64
        %v2096 = vpop.permute.xlu0 %2095
        %2097 = vrot.lane.b32.xlu0 %v2067, 64
        %v2098 = vpop.permute.xlu0 %2097
        %2099 = vrot.lane.b32.xlu0 %v2068, 64
        %v2100 = vpop.permute.xlu0 %2099
        %v2101 = vadd.f32 %v2053, %v2070
        %v2102 = vadd.f32 %v2054, %v2072
        %v2103 = vadd.f32 %v2055, %v2074
        %v2104 = vadd.f32 %v2056, %v2076
        %v2105 = vadd.f32 %v2057, %v2078
        %v2106 = vadd.f32 %v2058, %v2080
        %v2107 = vadd.f32 %v2059, %v2082
        %v2108 = vadd.f32 %v2060, %v2084
        %v2109 = vadd.f32 %v2061, %v2086
        %v2110 = vadd.f32 %v2062, %v2088
        %v2111 = vadd.f32 %v2063, %v2090
        %v2112 = vadd.f32 %v2064, %v2092
        %v2113 = vadd.f32 %v2065, %v2094
        %v2114 = vadd.f32 %v2066, %v2096
        %v2115 = vadd.f32 %v2067, %v2098
        %v2116 = vadd.f32 %v2068, %v2100
        %v2117 = vrsqrt.pop %v2101
        %v2118 = vmul.f32 %v2101, %v2117
        %vm2119 = vcmp.eq.f32.partialorder %v2101, inf
        %v2120 = vsel %vm2119, %v2101, %v2118
        %vm2121 = vcmp.eq.f32.partialorder %v2101, 0.0
        %v2122 = vand.u32 %v2101, 2147483648
        %v2123 = vsel %vm2121, %v2122, %v2120
        %v2124 = vrsqrt.pop %v2102
        %v2125 = vmul.f32 %v2102, %v2124
        %vm2126 = vcmp.eq.f32.partialorder %v2102, inf
        %v2127 = vsel %vm2126, %v2102, %v2125
        %vm2128 = vcmp.eq.f32.partialorder %v2102, 0.0
        %v2129 = vand.u32 %v2102, 2147483648
        %v2130 = vsel %vm2128, %v2129, %v2127
        %v2131 = vrsqrt.pop %v2103
        %v2132 = vmul.f32 %v2103, %v2131
        %vm2133 = vcmp.eq.f32.partialorder %v2103, inf
        %v2134 = vsel %vm2133, %v2103, %v2132
        %vm2135 = vcmp.eq.f32.partialorder %v2103, 0.0
        %v2136 = vand.u32 %v2103, 2147483648
        %v2137 = vsel %vm2135, %v2136, %v2134
        %v2138 = vrsqrt.pop %v2104
        %v2139 = vmul.f32 %v2104, %v2138
        %vm2140 = vcmp.eq.f32.partialorder %v2104, inf
        %v2141 = vsel %vm2140, %v2104, %v2139
        %vm2142 = vcmp.eq.f32.partialorder %v2104, 0.0
        %v2143 = vand.u32 %v2104, 2147483648
        %v2144 = vsel %vm2142, %v2143, %v2141
        %v2145 = vrsqrt.pop %v2105
        %v2146 = vmul.f32 %v2105, %v2145
        %vm2147 = vcmp.eq.f32.partialorder %v2105, inf
        %v2148 = vsel %vm2147, %v2105, %v2146
        %vm2149 = vcmp.eq.f32.partialorder %v2105, 0.0
        %v2150 = vand.u32 %v2105, 2147483648
        %v2151 = vsel %vm2149, %v2150, %v2148
        %v2152 = vrsqrt.pop %v2106
        %v2153 = vmul.f32 %v2106, %v2152
        %vm2154 = vcmp.eq.f32.partialorder %v2106, inf
        %v2155 = vsel %vm2154, %v2106, %v2153
        %vm2156 = vcmp.eq.f32.partialorder %v2106, 0.0
        %v2157 = vand.u32 %v2106, 2147483648
        %v2158 = vsel %vm2156, %v2157, %v2155
        %v2159 = vrsqrt.pop %v2107
        %v2160 = vmul.f32 %v2107, %v2159
        %vm2161 = vcmp.eq.f32.partialorder %v2107, inf
        %v2162 = vsel %vm2161, %v2107, %v2160
        %vm2163 = vcmp.eq.f32.partialorder %v2107, 0.0
        %v2164 = vand.u32 %v2107, 2147483648
        %v2165 = vsel %vm2163, %v2164, %v2162
        %v2166 = vrsqrt.pop %v2108
        %v2167 = vmul.f32 %v2108, %v2166
        %vm2168 = vcmp.eq.f32.partialorder %v2108, inf
        %v2169 = vsel %vm2168, %v2108, %v2167
        %vm2170 = vcmp.eq.f32.partialorder %v2108, 0.0
        %v2171 = vand.u32 %v2108, 2147483648
        %v2172 = vsel %vm2170, %v2171, %v2169
        %v2173 = vrsqrt.pop %v2109
        %v2174 = vmul.f32 %v2109, %v2173
        %vm2175 = vcmp.eq.f32.partialorder %v2109, inf
        %v2176 = vsel %vm2175, %v2109, %v2174
        %vm2177 = vcmp.eq.f32.partialorder %v2109, 0.0
        %v2178 = vand.u32 %v2109, 2147483648
        %v2179 = vsel %vm2177, %v2178, %v2176
        %v2180 = vrsqrt.pop %v2110
        %v2181 = vmul.f32 %v2110, %v2180
        %vm2182 = vcmp.eq.f32.partialorder %v2110, inf
        %v2183 = vsel %vm2182, %v2110, %v2181
        %vm2184 = vcmp.eq.f32.partialorder %v2110, 0.0
        %v2185 = vand.u32 %v2110, 2147483648
        %v2186 = vsel %vm2184, %v2185, %v2183
        %v2187 = vrsqrt.pop %v2111
        %v2188 = vmul.f32 %v2111, %v2187
        %vm2189 = vcmp.eq.f32.partialorder %v2111, inf
        %v2190 = vsel %vm2189, %v2111, %v2188
        %vm2191 = vcmp.eq.f32.partialorder %v2111, 0.0
        %v2192 = vand.u32 %v2111, 2147483648
        %v2193 = vsel %vm2191, %v2192, %v2190
        %v2194 = vrsqrt.pop %v2112
        %v2195 = vmul.f32 %v2112, %v2194
        %vm2196 = vcmp.eq.f32.partialorder %v2112, inf
        %v2197 = vsel %vm2196, %v2112, %v2195
        %vm2198 = vcmp.eq.f32.partialorder %v2112, 0.0
        %v2199 = vand.u32 %v2112, 2147483648
        %v2200 = vsel %vm2198, %v2199, %v2197
        %v2201 = vrsqrt.pop %v2113
        %v2202 = vmul.f32 %v2113, %v2201
        %vm2203 = vcmp.eq.f32.partialorder %v2113, inf
        %v2204 = vsel %vm2203, %v2113, %v2202
        %vm2205 = vcmp.eq.f32.partialorder %v2113, 0.0
        %v2206 = vand.u32 %v2113, 2147483648
        %v2207 = vsel %vm2205, %v2206, %v2204
        %v2208 = vrsqrt.pop %v2114
        %v2209 = vmul.f32 %v2114, %v2208
        %vm2210 = vcmp.eq.f32.partialorder %v2114, inf
        %v2211 = vsel %vm2210, %v2114, %v2209
        %vm2212 = vcmp.eq.f32.partialorder %v2114, 0.0
        %v2213 = vand.u32 %v2114, 2147483648
        %v2214 = vsel %vm2212, %v2213, %v2211
        %v2215 = vrsqrt.pop %v2115
        %v2216 = vmul.f32 %v2115, %v2215
        %vm2217 = vcmp.eq.f32.partialorder %v2115, inf
        %v2218 = vsel %vm2217, %v2115, %v2216
        %vm2219 = vcmp.eq.f32.partialorder %v2115, 0.0
        %v2220 = vand.u32 %v2115, 2147483648
        %v2221 = vsel %vm2219, %v2220, %v2218
        %v2222 = vrsqrt.pop %v2116
        %v2223 = vmul.f32 %v2116, %v2222
        %vm2224 = vcmp.eq.f32.partialorder %v2116, inf
        %v2225 = vsel %vm2224, %v2116, %v2223
        %vm2226 = vcmp.eq.f32.partialorder %v2116, 0.0
        %v2227 = vand.u32 %v2116, 2147483648
        %v2228 = vsel %vm2226, %v2227, %v2225
        %v2229 = vlaneseq
        %v2230 = vand.u32 %v2229, 127
        %vm2231 = vcmp.lt.s32.totalorder %v2230, 64
        %v2232 = vsel %vm2231, %v2123, %v1694
        %v2233 = vsel %vm2231, %v2130, %v1696
        %v2234 = vsel %vm2231, %v2137, %v1698
        %v2235 = vsel %vm2231, %v2144, %v1700
        %v2236 = vsel %vm2231, %v2151, %v1702
        %v2237 = vsel %vm2231, %v2158, %v1704
        %v2238 = vsel %vm2231, %v2165, %v1706
        %v2239 = vsel %vm2231, %v2172, %v1708
        %v2240 = vsel %vm2231, %v2179, %v1710
        %v2241 = vsel %vm2231, %v2186, %v1712
        %v2242 = vsel %vm2231, %v2193, %v1714
        %v2243 = vsel %vm2231, %v2200, %v1716
        %v2244 = vsel %vm2231, %v2207, %v1718
        %v2245 = vsel %vm2231, %v2214, %v1720
        %v2246 = vsel %vm2231, %v2221, %v1722
        %v2247 = vsel %vm2231, %v2228, %v1724
        %2248 = vst [vmem:[%s513] sm:$0xff] %v2232
        %2249 = vst [vmem:[%s513 + $0x8] sm:$0xff] %v2233
        %2250 = vst [vmem:[%s513 + $0x10] sm:$0xff] %v2234
        %2251 = vst [vmem:[%s513 + $0x18] sm:$0xff] %v2235
        %2252 = vst [vmem:[%s513 + $0x20] sm:$0xff] %v2236
        %2253 = vst [vmem:[%s513 + $0x28] sm:$0xff] %v2237
        %2254 = vst [vmem:[%s513 + $0x30] sm:$0xff] %v2238
        %2255 = vst [vmem:[%s513 + $0x38] sm:$0xff] %v2239
        %2256 = vst [vmem:[%s513 + $0x40] sm:$0xff] %v2240
        %2257 = vst [vmem:[%s513 + $0x48] sm:$0xff] %v2241
        %2258 = vst [vmem:[%s513 + $0x50] sm:$0xff] %v2242
        %2259 = vst [vmem:[%s513 + $0x58] sm:$0xff] %v2243
        %2260 = vst [vmem:[%s513 + $0x60] sm:$0xff] %v2244
        %2261 = vst [vmem:[%s513 + $0x68] sm:$0xff] %v2245
        %2262 = vst [vmem:[%s513 + $0x70] sm:$0xff] %v2246
        %2263 = vst [vmem:[%s513 + $0x78] sm:$0xff] %v2247
        %s2264 = sand.u32 %s256, 1
        %s2265 = scalar_lea.sflag [#allocation3], %s2264
        %s2266 = sand.u32 %s256, 1
        %s2267 = smul.addr %s2266, 128
        %s2268 = scalar_lea.vmem [#allocation2], %s2267
        // Predicated region
        $region49: #{tpu_custom_call.1} parent=47 // pred_check
          %p2269 = pneg %p266
        $region50: #{tpu_custom_call.1} parent=47 // pred_check_branch
          %2271 = sbr.rel (%p2269) target = $region52
        $region51: #{tpu_custom_call.1} parent=47 // pred_region
          %s2272 = smul.u32 16, %s26
          %s2274 = ssub.s32 2048, 2048
          %2275 = vsyncadd %s2265, %s2274
          %s2276 = smul.addr %s25, 48
          %s2277 = sadd.s32 %s2272, %s2276
          %s2278 = smul.addr %s2277, 128
          %s2279 = scalar_lea.hbm %s7, %s2278
          %s2280 = sshll.u32 %s2268, 4
          %s2281 = int_to_ptr.vmem [resolvable:$true] %s2280
          %2286 = dma.vmem_to_hbm [thread:$0]  %s2281, 2048, %s2279, %s2265, 128, 128, 8
        $region52: #{tpu_custom_call.1} parent=47 // pred_fallthru
          _
      $region48: #{tpu_custom_call.1} parent=5 // pred_fallthru
        _
      %p2287 = scmp.le.s32.totalorder 2, %s16
      // Predicated region
      $region53: #{tpu_custom_call.1} parent=5 // pred_check
        %p2288 = pneg %p2287
      $region54: #{tpu_custom_call.1} parent=5 // pred_check_branch
        %2290 = sbr.rel (%p2288) target = $region56
      $region55: #{tpu_custom_call.1} parent=5 // pred_region
        %s2291 = ssub.s32 %s16, 2
        // Predicated region
        $region57: #{tpu_custom_call.1} parent=55 // pred_check
          %p2292 = pneg %p272
        $region58: #{tpu_custom_call.1} parent=55 // pred_check_branch
          %2294 = sbr.rel (%p2292) target = $region60
        $region59: #{tpu_custom_call.1} parent=55 // pred_region
          %s2295 = sand.u32 %s257, 1
          %s2296 = scalar_lea.sflag [#allocation3], %s2295
          %s2297 = sand.u32 %s257, 1
          %s2298 = smul.addr %s2297, 128
          %s2299 = scalar_lea.vmem [#allocation2], %s2298
          %2300 = dma.done %s2296, 2048
        $region60: #{tpu_custom_call.1} parent=55 // pred_fallthru
          _
      $region56: #{tpu_custom_call.1} parent=5 // pred_fallthru
        _
    $region6: #{tpu_custom_call.1} parent=1 // loop_footer
      %s20 = sadd.s32 1, %s16
    $region7: #{tpu_custom_call.1} parent=1 // loop_footer_branch
      %15 = sbr.rel target = $region3
    $region8: #{tpu_custom_call.1} parent=1 // loop_exit
      _
    %2301 = vsyncpa [#allocation3], 1
    %s2302 = scalar_lea.sflag [#allocation3], 1
    %2303 = vsyncpa %s2302, 1

</llo_original>
